<compile_context>
chip_gen: v7x
topology: tpu7x:2x2x1
jax: 0.10.0
libtpu: 0.0.40
codegen_flags: <defaults>
</compile_context>

<pallas_src>
import math

import jax
import jax.numpy as jnp
from jax.experimental import pallas as pl
from jax.experimental.pallas import tpu as pltpu

# ----------------------- small synthetic model config -----------------------
IMG = 16          # image size
PATCH = 8         # patch size
CHANNELS = 3
GRID_SIDE = IMG // PATCH
NUM_PATCHES = GRID_SIDE * GRID_SIDE   # 4
SEQ = NUM_PATCHES + 1                 # +CLS = 5
DIM = 32                              # hidden size
HEADS = 4
HEAD_DIM = DIM // HEADS
MLP = 64
LAYERS = 3
SELECT_LAYER = -2                     # args.mm_vision_select_layer
EPS = 1e-5
PATCH_DIM = CHANNELS * PATCH * PATCH


def _layer_norm(x, g, b):
    mu = jnp.mean(x, axis=-1, keepdims=True)
    var = jnp.mean((x - mu) ** 2, axis=-1, keepdims=True)
    return (x - mu) * jax.lax.rsqrt(var + EPS) * g + b


def _gelu_tanh(x):
    # TODO(synk): nn.GELU() default is the exact erf-GELU; tanh approximation
    # is used to stay on Mosaic-supported transcendentals (tanh/exp).
    c = math.sqrt(2.0 / math.pi)
    return 0.5 * x * (1.0 + jnp.tanh(c * (x + 0.044715 * x * x * x)))


# --------------------------------- kernel -----------------------------------
# grid = (B, n_layers).  program_id(0)=image, program_id(1)=layer.
# The output block (one image's (SEQ, DIM) activation) is the residual stream:
# its index_map is constant in the layer axis, so it stays resident in VMEM
# across layers and is written back to HBM only when the image index advances.
def _vit_kernel(patches_ref, cls_pos_ref, patch_w_ref,
                ln_pre_g_ref, ln_pre_b_ref,
                ln1_g_ref, ln1_b_ref, qkv_w_ref, qkv_b_ref,
                proj_w_ref, proj_b_ref,
                ln2_g_ref, ln2_b_ref, fc1_w_ref, fc1_b_ref,
                fc2_w_ref, fc2_b_ref,
                out_ref):
    l = pl.program_id(1)
    scale = 1.0 / math.sqrt(HEAD_DIM)

    # ---- embedding + ln_pre, only on the first layer step of each image ----
    @pl.when(l == 0)
    def _():
        # Patch embedding: stride==kernel conv as one (SEQ, C*P*P) x (C*P*P, D)
        # matmul. Row 0 of the patch block is all-zero (CLS slot), so adding
        # cls_pos (pos-emb with class_embedding folded into row 0) reproduces
        # cat([cls, conv_patches], 1) + pos_emb (conv1 has no bias).
        x0 = jnp.dot(patches_ref[0], patch_w_ref[...],
                     preferred_element_type=jnp.float32)
        x0 = x0 + cls_pos_ref[...]
        x0 = _layer_norm(x0, ln_pre_g_ref[...], ln_pre_b_ref[...])
        out_ref[0] = x0

    x = out_ref[0]                                    # (SEQ, DIM) residual

    # ---- pre-norm multi-head self-attention (per image -> no mask needed) ---
    h = _layer_norm(x, ln1_g_ref[0], ln1_b_ref[0])
    qkv_w = qkv_w_ref[0]
    qkv = jnp.dot(h, qkv_w, preferred_element_type=jnp.float32) + qkv_b_ref[0]
    q = qkv[:, 0:DIM] * scale                         # fold 1/sqrt(d) once
    k = qkv[:, DIM:2 * DIM]
    v = qkv[:, 2 * DIM:3 * DIM]

    proj_w = proj_w_ref[0]                            # (DIM, DIM)
    attn_acc = jnp.zeros((SEQ, DIM), jnp.float32)
    for hh in range(HEADS):
        lo = hh * HEAD_DIM
        qh = q[:, lo:lo + HEAD_DIM]
        kh = k[:, lo:lo + HEAD_DIM]
        vh = v[:, lo:lo + HEAD_DIM]
        s = jax.lax.dot_general(qh, kh, (((1,), (1,)), ((), ())),
                                preferred_element_type=jnp.float32)
        s = s - jnp.max(s, axis=-1, keepdims=True)
        p = jnp.exp(s)
        p = p * pl.reciprocal(jnp.sum(p, axis=-1, keepdims=True), approx=True)
        oh = jnp.dot(p, vh, preferred_element_type=jnp.float32)  # (SEQ, hd)
        # Fold head output straight into the output projection (no concat):
        attn_acc = attn_acc + jnp.dot(oh, proj_w[lo:lo + HEAD_DIM, :],
                                      preferred_element_type=jnp.float32)
    x = x + attn_acc + proj_b_ref[0]

    # ---- pre-norm MLP ----
    h = _layer_norm(x, ln2_g_ref[0], ln2_b_ref[0])
    h = jnp.dot(h, fc1_w_ref[0],
                preferred_element_type=jnp.float32) + fc1_b_ref[0]
    h = _gelu_tanh(h)
    h = jnp.dot(h, fc2_w_ref[0],
                preferred_element_type=jnp.float32) + fc2_b_ref[0]
    x = x + h

    out_ref[0] = x


# -------------------------------- wrapper ------------------------------------
def openclip_vision_tower_forward(images, params):
    """images: NCHW float32 (B, C, H, W). Returns (B, NUM_PATCHES, DIM)."""
    B, C, H, W = images.shape
    gh, gw = H // PATCH, W // PATCH
    num_patches = gh * gw
    seq = num_patches + 1

    # Glue: extract non-overlapping patches, flatten in (C, ph, pw) order to
    # match the PyTorch conv weight layout (D, C, P, P), prepend an all-zero
    # "patch" per image for the CLS position.
    patches = images.reshape(B, C, gh, PATCH, gw, PATCH)
    patches = patches.transpose(0, 2, 4, 1, 3, 5).reshape(B, num_patches, PATCH_DIM)
    patches = jnp.concatenate(
        [jnp.zeros((B, 1, PATCH_DIM), patches.dtype), patches], axis=1)

    # Fold class embedding into row 0 of the positional embedding (one copy,
    # reused per image inside the kernel).
    cls_pos = params['pos'].at[0:1].add(params['cls'])          # (SEQ, DIM)

    # Only run blocks up to the hooked layer: blocks after hidden_states[sel]
    # never influence the returned features.
    sel = SELECT_LAYER if SELECT_LAYER >= 0 else LAYERS + SELECT_LAYER
    nl = sel + 1

    def vec3(p):   # (L, D) per-layer vector params -> (nl, 1, D) for tiling
        return p[:nl].reshape(nl, 1, -1)

    args = (
        patches,                                   # (B, seq, PATCH_DIM)
        cls_pos,                                   # (seq, DIM)
        params['patch_w'],                         # (PATCH_DIM, DIM)
        params['ln_pre_g'], params['ln_pre_b'],    # (1, DIM)
        vec3(params['ln1_g']), vec3(params['ln1_b']),
        params['qkv_w'][:nl], vec3(params['qkv_b']),
        params['proj_w'][:nl], vec3(params['proj_b']),
        vec3(params['ln2_g']), vec3(params['ln2_b']),
        params['fc1_w'][:nl], vec3(params['fc1_b']),
        params['fc2_w'][:nl], vec3(params['fc2_b']),
    )

    def const_spec(shape):
        return pl.BlockSpec(shape, lambda b, l: (0,) * len(shape))

    def layer_spec(full_shape):   # (nl, A, B) -> per-layer (1, A, B) block
        return pl.BlockSpec((1,) + full_shape[1:], lambda b, l: (l, 0, 0))

    in_specs = [
        pl.BlockSpec((1, seq, PATCH_DIM), lambda b, l: (b, 0, 0)),  # patches
        const_spec((seq, DIM)),                                     # cls_pos
        const_spec((PATCH_DIM, DIM)),                               # patch_w
        const_spec((1, DIM)), const_spec((1, DIM)),                 # ln_pre
        layer_spec((nl, 1, DIM)), layer_spec((nl, 1, DIM)),         # ln1
        layer_spec((nl, DIM, 3 * DIM)), layer_spec((nl, 1, 3 * DIM)),  # qkv
        layer_spec((nl, DIM, DIM)), layer_spec((nl, 1, DIM)),       # proj
        layer_spec((nl, 1, DIM)), layer_spec((nl, 1, DIM)),         # ln2
        layer_spec((nl, DIM, MLP)), layer_spec((nl, 1, MLP)),       # fc1
        layer_spec((nl, MLP, DIM)), layer_spec((nl, 1, DIM)),       # fc2
    ]

    out = pl.pallas_call(
        _vit_kernel,
        out_shape=jax.ShapeDtypeStruct((B, seq, DIM), jnp.float32),
        grid=(B, nl),
        in_specs=in_specs,
        out_specs=pl.BlockSpec((1, seq, DIM), lambda b, l: (b, 0, 0)),
        compiler_params=pltpu.CompilerParams(
            dimension_semantics=("parallel", "arbitrary")),
    )(*args)

    # feature_select('patch'): drop the CLS token (pure slicing glue in XLA).
    feats = out[:, 1:, :]
    return feats.astype(images.dtype)


# ----------------------- deterministic parameter init ------------------------
def init_params(key):
    ks = jax.random.split(key, 8)
    s = 0.02

    def nrm(k, shape):
        return jax.random.normal(k, shape, jnp.float32) * s

    return dict(
        patch_w=nrm(ks[0], (PATCH_DIM, DIM)),        # conv1 weight, (C*P*P, D)
        cls=nrm(ks[1], (1, DIM)),                    # class_embedding
        pos=nrm(ks[2], (SEQ, DIM)),                  # positional_embedding
        ln_pre_g=jnp.ones((1, DIM), jnp.float32),
        ln_pre_b=jnp.zeros((1, DIM), jnp.float32),
        ln1_g=jnp.ones((LAYERS, DIM), jnp.float32),
        ln1_b=jnp.zeros((LAYERS, DIM), jnp.float32),
        qkv_w=nrm(ks[3], (LAYERS, DIM, 3 * DIM)),
        qkv_b=jnp.zeros((LAYERS, 3 * DIM), jnp.float32),
        proj_w=nrm(ks[4], (LAYERS, DIM, DIM)),
        proj_b=jnp.zeros((LAYERS, DIM), jnp.float32),
        ln2_g=jnp.ones((LAYERS, DIM), jnp.float32),
        ln2_b=jnp.zeros((LAYERS, DIM), jnp.float32),
        fc1_w=nrm(ks[5], (LAYERS, DIM, MLP)),
        fc1_b=jnp.zeros((LAYERS, MLP), jnp.float32),
        fc2_w=nrm(ks[6], (LAYERS, MLP, DIM)),
        fc2_b=jnp.zeros((LAYERS, DIM), jnp.float32),
    )


# --------------------------- pure-JAX reference ------------------------------
def reference_forward(images, params):
    B = images.shape[0]
    gh, gw = IMG // PATCH, IMG // PATCH
    hp = jax.lax.Precision.HIGHEST
    patches = images.reshape(B, CHANNELS, gh, PATCH, gw, PATCH)
    patches = patches.transpose(0, 2, 4, 1, 3, 5).reshape(B, gh * gw, PATCH_DIM)
    emb = jnp.einsum('bsp,pd->bsd', patches, params['patch_w'], precision=hp)
    cls = jnp.broadcast_to(params['cls'][None], (B, 1, DIM))
    x = jnp.concatenate([cls, emb], axis=1) + params['pos'][None]
    x = _layer_norm(x, params['ln_pre_g'], params['ln_pre_b'])
    sel = SELECT_LAYER if SELECT_LAYER >= 0 else LAYERS + SELECT_LAYER
    selected = x
    for l in range(LAYERS):
        h = _layer_norm(x, params['ln1_g'][l], params['ln1_b'][l])
        qkv = jnp.einsum('bsd,de->bse', h, params['qkv_w'][l], precision=hp)
        qkv = qkv + params['qkv_b'][l]
        q, k, v = jnp.split(qkv, 3, axis=-1)
        q = q.reshape(B, SEQ, HEADS, HEAD_DIM)
        k = k.reshape(B, SEQ, HEADS, HEAD_DIM)
        v = v.reshape(B, SEQ, HEADS, HEAD_DIM)
        s = jnp.einsum('bqhd,bkhd->bhqk', q, k, precision=hp) / math.sqrt(HEAD_DIM)
        p = jax.nn.softmax(s, axis=-1)
        attn = jnp.einsum('bhqk,bkhd->bqhd', p, v, precision=hp).reshape(B, SEQ, DIM)
        x = x + jnp.einsum('bsd,de->bse', attn, params['proj_w'][l], precision=hp) \
              + params['proj_b'][l]
        h = _layer_norm(x, params['ln2_g'][l], params['ln2_b'][l])
        h = _gelu_tanh(jnp.einsum('bsd,dm->bsm', h, params['fc1_w'][l], precision=hp)
                       + params['fc1_b'][l])
        x = x + jnp.einsum('bsm,md->bsd', h, params['fc2_w'][l], precision=hp) \
              + params['fc2_b'][l]
        if l == sel:
            selected = x
    return selected[:, 1:, :]


if __name__ == "__main__":
    key = jax.random.PRNGKey(0)
    pkey, xkey = jax.random.split(key)
    params = init_params(pkey)
    images = jax.random.normal(xkey, (2, CHANNELS, IMG, IMG), jnp.float32)

    out = jax.block_until_ready(openclip_vision_tower_forward(images, params))
    ref = jax.block_until_ready(reference_forward(images, params))

    assert out.shape == (2, NUM_PATCHES, DIM), out.shape
    err = float(jnp.max(jnp.abs(out - ref)))
    assert err < 1e-2, err
    print("KERNEL_OK")
</pallas_src>

<mosaic_0001>
module attributes {stable_mosaic.version = 11 : i64} {
  func.func @_vit_kernel(%arg0: i32, %arg1: i32, %arg2: memref<1x5x192xf32, #tpu.memory_space<vmem>>, %arg3: memref<5x32xf32, #tpu.memory_space<vmem>>, %arg4: memref<192x32xf32, #tpu.memory_space<vmem>>, %arg5: memref<1x32xf32, #tpu.memory_space<vmem>>, %arg6: memref<1x32xf32, #tpu.memory_space<vmem>>, %arg7: memref<1x1x32xf32, #tpu.memory_space<vmem>>, %arg8: memref<1x1x32xf32, #tpu.memory_space<vmem>>, %arg9: memref<1x32x96xf32, #tpu.memory_space<vmem>>, %arg10: memref<1x1x96xf32, #tpu.memory_space<vmem>>, %arg11: memref<1x32x32xf32, #tpu.memory_space<vmem>>, %arg12: memref<1x1x32xf32, #tpu.memory_space<vmem>>, %arg13: memref<1x1x32xf32, #tpu.memory_space<vmem>>, %arg14: memref<1x1x32xf32, #tpu.memory_space<vmem>>, %arg15: memref<1x32x64xf32, #tpu.memory_space<vmem>>, %arg16: memref<1x1x64xf32, #tpu.memory_space<vmem>>, %arg17: memref<1x64x32xf32, #tpu.memory_space<vmem>>, %arg18: memref<1x1x32xf32, #tpu.memory_space<vmem>>, %arg19: memref<1x5x32xf32, #tpu.memory_space<vmem>>) attributes {dimension_semantics = [#tpu.dimension_semantics<parallel>, #tpu.dimension_semantics<arbitrary>], iteration_bounds = array<i64: 2, 2>, scalar_prefetch = 0 : i64, scratch_operands = 0 : i64, tpu.core_type = #tpu.core_type<tc>, window_params = [{transform_indices = @transform_0, window_bounds = array<i64: 1, 5, 192>}, {pipeline_mode = #tpu.pipeline_mode<synchronous>, transform_indices = @transform_1, window_bounds = array<i64: 5, 32>}, {pipeline_mode = #tpu.pipeline_mode<synchronous>, transform_indices = @transform_2, window_bounds = array<i64: 192, 32>}, {pipeline_mode = #tpu.pipeline_mode<synchronous>, transform_indices = @transform_3, window_bounds = array<i64: 1, 32>}, {pipeline_mode = #tpu.pipeline_mode<synchronous>, transform_indices = @transform_4, window_bounds = array<i64: 1, 32>}, {transform_indices = @transform_5, window_bounds = array<i64: 1, 1, 32>}, {transform_indices = @transform_6, window_bounds = array<i64: 1, 1, 32>}, {transform_indices = @transform_7, window_bounds = array<i64: 1, 32, 96>}, {transform_indices = @transform_8, window_bounds = array<i64: 1, 1, 96>}, {transform_indices = @transform_9, window_bounds = array<i64: 1, 32, 32>}, {transform_indices = @transform_10, window_bounds = array<i64: 1, 1, 32>}, {transform_indices = @transform_11, window_bounds = array<i64: 1, 1, 32>}, {transform_indices = @transform_12, window_bounds = array<i64: 1, 1, 32>}, {transform_indices = @transform_13, window_bounds = array<i64: 1, 32, 64>}, {transform_indices = @transform_14, window_bounds = array<i64: 1, 1, 64>}, {transform_indices = @transform_15, window_bounds = array<i64: 1, 64, 32>}, {transform_indices = @transform_16, window_bounds = array<i64: 1, 1, 32>}, {transform_indices = @transform_17, window_bounds = array<i64: 1, 5, 32>}]} {
    %c0_i32 = arith.constant 0 : i32
    %0 = arith.cmpi eq, %arg1, %c0_i32 : i32
    %1 = arith.extui %0 : i1 to i32
    %c0_i32_0 = arith.constant 0 : i32
    %2 = arith.cmpi ne, %1, %c0_i32_0 : i32
    scf.if %2 {
      %c0_80 = arith.constant 0 : index
      %c0_81 = arith.constant 0 : index
      %c0_82 = arith.constant 0 : index
      %180 = vector.load %arg2[%c0_80, %c0_81, %c0_82] : memref<1x5x192xf32, #tpu.memory_space<vmem>>, vector<1x5x192xf32>
      %181 = vector.shape_cast %180 : vector<1x5x192xf32> to vector<5x192xf32>
      %c0_83 = arith.constant 0 : index
      %c0_84 = arith.constant 0 : index
      %182 = vector.load %arg4[%c0_83, %c0_84] : memref<192x32xf32, #tpu.memory_space<vmem>>, vector<192x32xf32>
      %cst_85 = arith.constant dense<0.000000e+00> : vector<5x32xf32>
      %183 = tpu.matmul %181, %182, %cst_85 {dimension_numbers = #tpu.dot_dimension_numbers<[1], [0], [0], [1], [0, 0, 1, 1], [], []>} : vector<5x192xf32>, vector<192x32xf32>, vector<5x32xf32> -> vector<5x32xf32>
      %c0_86 = arith.constant 0 : index
      %c0_87 = arith.constant 0 : index
      %184 = vector.load %arg3[%c0_86, %c0_87] : memref<5x32xf32, #tpu.memory_space<vmem>>, vector<5x32xf32>
      %185 = arith.addf %183, %184 : vector<5x32xf32>
      %c0_88 = arith.constant 0 : index
      %c0_89 = arith.constant 0 : index
      %186 = vector.load %arg5[%c0_88, %c0_89] : memref<1x32xf32, #tpu.memory_space<vmem>>, vector<1x32xf32>
      %c0_90 = arith.constant 0 : index
      %c0_91 = arith.constant 0 : index
      %187 = vector.load %arg6[%c0_90, %c0_91] : memref<1x32xf32, #tpu.memory_space<vmem>>, vector<1x32xf32>
      %cst_92 = arith.constant dense<0.000000e+00> : vector<5xf32>
      %188 = vector.multi_reduction <add>, %185, %cst_92 [1] : vector<5x32xf32> to vector<5xf32>
      %189 = vector.shape_cast %188 : vector<5xf32> to vector<5x1xf32>
      %cst_93 = arith.constant 3.200000e+01 : f32
      %190 = vector.broadcast %cst_93 : f32 to vector<5x1xf32>
      %191 = arith.divf %189, %190 : vector<5x1xf32>
      %192 = vector.broadcast %191 : vector<5x1xf32> to vector<5x32xf32>
      %193 = arith.subf %185, %192 : vector<5x32xf32>
      %194 = arith.mulf %193, %193 : vector<5x32xf32>
      %cst_94 = arith.constant dense<0.000000e+00> : vector<5xf32>
      %195 = vector.multi_reduction <add>, %194, %cst_94 [1] : vector<5x32xf32> to vector<5xf32>
      %196 = vector.shape_cast %195 : vector<5xf32> to vector<5x1xf32>
      %cst_95 = arith.constant 3.200000e+01 : f32
      %197 = vector.broadcast %cst_95 : f32 to vector<5x1xf32>
      %198 = arith.divf %196, %197 : vector<5x1xf32>
      %199 = vector.broadcast %191 : vector<5x1xf32> to vector<5x32xf32>
      %200 = arith.subf %185, %199 : vector<5x32xf32>
      %cst_96 = arith.constant 9.99999974E-6 : f32
      %201 = vector.broadcast %cst_96 : f32 to vector<5x1xf32>
      %202 = arith.addf %198, %201 : vector<5x1xf32>
      %203 = math.rsqrt %202 : vector<5x1xf32>
      %204 = vector.broadcast %203 : vector<5x1xf32> to vector<5x32xf32>
      %205 = arith.mulf %200, %204 : vector<5x32xf32>
      %206 = vector.broadcast %186 : vector<1x32xf32> to vector<5x32xf32>
      %207 = arith.mulf %205, %206 : vector<5x32xf32>
      %208 = vector.broadcast %187 : vector<1x32xf32> to vector<5x32xf32>
      %209 = arith.addf %207, %208 : vector<5x32xf32>
      %c0_97 = arith.constant 0 : index
      %c0_98 = arith.constant 0 : index
      %c0_99 = arith.constant 0 : index
      %210 = vector.load %arg19[%c0_97, %c0_98, %c0_99] : memref<1x5x32xf32, #tpu.memory_space<vmem>>, vector<1x5x32xf32>
      %211 = vector.shape_cast %210 : vector<1x5x32xf32> to vector<5x32xf32>
      %212 = vector.shape_cast %209 : vector<5x32xf32> to vector<1x5x32xf32>
      tpu.vector_store %arg19[%c0_97, %c0_98, %c0_99], %212 {strides = array<i32>} : memref<1x5x32xf32, #tpu.memory_space<vmem>>, vector<1x5x32xf32>,
    } else {
    }
    %c0 = arith.constant 0 : index
    %c0_1 = arith.constant 0 : index
    %c0_2 = arith.constant 0 : index
    %3 = vector.load %arg19[%c0, %c0_1, %c0_2] : memref<1x5x32xf32, #tpu.memory_space<vmem>>, vector<1x5x32xf32>
    %4 = vector.shape_cast %3 : vector<1x5x32xf32> to vector<5x32xf32>
    %c0_3 = arith.constant 0 : index
    %c0_4 = arith.constant 0 : index
    %c0_5 = arith.constant 0 : index
    %5 = vector.load %arg7[%c0_3, %c0_4, %c0_5] : memref<1x1x32xf32, #tpu.memory_space<vmem>>, vector<1x1x32xf32>
    %6 = vector.shape_cast %5 : vector<1x1x32xf32> to vector<1x32xf32>
    %c0_6 = arith.constant 0 : index
    %c0_7 = arith.constant 0 : index
    %c0_8 = arith.constant 0 : index
    %7 = vector.load %arg8[%c0_6, %c0_7, %c0_8] : memref<1x1x32xf32, #tpu.memory_space<vmem>>, vector<1x1x32xf32>
    %8 = vector.shape_cast %7 : vector<1x1x32xf32> to vector<1x32xf32>
    %cst = arith.constant dense<0.000000e+00> : vector<5xf32>
    %9 = vector.multi_reduction <add>, %4, %cst [1] : vector<5x32xf32> to vector<5xf32>
    %10 = vector.shape_cast %9 : vector<5xf32> to vector<5x1xf32>
    %cst_9 = arith.constant 3.200000e+01 : f32
    %11 = vector.broadcast %cst_9 : f32 to vector<5x1xf32>
    %12 = arith.divf %10, %11 : vector<5x1xf32>
    %13 = vector.broadcast %12 : vector<5x1xf32> to vector<5x32xf32>
    %14 = arith.subf %4, %13 : vector<5x32xf32>
    %15 = arith.mulf %14, %14 : vector<5x32xf32>
    %cst_10 = arith.constant dense<0.000000e+00> : vector<5xf32>
    %16 = vector.multi_reduction <add>, %15, %cst_10 [1] : vector<5x32xf32> to vector<5xf32>
    %17 = vector.shape_cast %16 : vector<5xf32> to vector<5x1xf32>
    %cst_11 = arith.constant 3.200000e+01 : f32
    %18 = vector.broadcast %cst_11 : f32 to vector<5x1xf32>
    %19 = arith.divf %17, %18 : vector<5x1xf32>
    %20 = vector.broadcast %12 : vector<5x1xf32> to vector<5x32xf32>
    %21 = arith.subf %4, %20 : vector<5x32xf32>
    %cst_12 = arith.constant 9.99999974E-6 : f32
    %22 = vector.broadcast %cst_12 : f32 to vector<5x1xf32>
    %23 = arith.addf %19, %22 : vector<5x1xf32>
    %24 = math.rsqrt %23 : vector<5x1xf32>
    %25 = vector.broadcast %24 : vector<5x1xf32> to vector<5x32xf32>
    %26 = arith.mulf %21, %25 : vector<5x32xf32>
    %27 = vector.broadcast %6 : vector<1x32xf32> to vector<5x32xf32>
    %28 = arith.mulf %26, %27 : vector<5x32xf32>
    %29 = vector.broadcast %8 : vector<1x32xf32> to vector<5x32xf32>
    %30 = arith.addf %28, %29 : vector<5x32xf32>
    %c0_13 = arith.constant 0 : index
    %c0_14 = arith.constant 0 : index
    %c0_15 = arith.constant 0 : index
    %31 = vector.load %arg9[%c0_13, %c0_14, %c0_15] : memref<1x32x96xf32, #tpu.memory_space<vmem>>, vector<1x32x96xf32>
    %32 = vector.shape_cast %31 : vector<1x32x96xf32> to vector<32x96xf32>
    %cst_16 = arith.constant dense<0.000000e+00> : vector<5x96xf32>
    %33 = tpu.matmul %30, %32, %cst_16 {dimension_numbers = #tpu.dot_dimension_numbers<[1], [0], [0], [1], [0, 0, 1, 1], [], []>} : vector<5x32xf32>, vector<32x96xf32>, vector<5x96xf32> -> vector<5x96xf32>
    %c0_17 = arith.constant 0 : index
    %c0_18 = arith.constant 0 : index
    %c0_19 = arith.constant 0 : index
    %34 = vector.load %arg10[%c0_17, %c0_18, %c0_19] : memref<1x1x96xf32, #tpu.memory_space<vmem>>, vector<1x1x96xf32>
    %35 = vector.shape_cast %34 : vector<1x1x96xf32> to vector<1x96xf32>
    %36 = vector.broadcast %35 : vector<1x96xf32> to vector<5x96xf32>
    %37 = arith.addf %33, %36 : vector<5x96xf32>
    %38 = vector.extract_strided_slice %37 {offsets = [0, 0], sizes = [5, 32], strides = [1, 1]} : vector<5x96xf32> to vector<5x32xf32>
    %cst_20 = arith.constant 0.353553385 : f32
    %39 = vector.broadcast %cst_20 : f32 to vector<5x32xf32>
    %40 = arith.mulf %38, %39 : vector<5x32xf32>
    %41 = vector.extract_strided_slice %37 {offsets = [0, 32], sizes = [5, 32], strides = [1, 1]} : vector<5x96xf32> to vector<5x32xf32>
    %42 = vector.extract_strided_slice %37 {offsets = [0, 64], sizes = [5, 32], strides = [1, 1]} : vector<5x96xf32> to vector<5x32xf32>
    %c0_21 = arith.constant 0 : index
    %c0_22 = arith.constant 0 : index
    %c0_23 = arith.constant 0 : index
    %43 = vector.load %arg11[%c0_21, %c0_22, %c0_23] : memref<1x32x32xf32, #tpu.memory_space<vmem>>, vector<1x32x32xf32>
    %44 = vector.shape_cast %43 : vector<1x32x32xf32> to vector<32x32xf32>
    %cst_24 = arith.constant 0.000000e+00 : f32
    %45 = vector.broadcast %cst_24 : f32 to vector<5x32xf32>
    %46 = vector.extract_strided_slice %40 {offsets = [0, 0], sizes = [5, 8], strides = [1, 1]} : vector<5x32xf32> to vector<5x8xf32>
    %47 = vector.extract_strided_slice %41 {offsets = [0, 0], sizes = [5, 8], strides = [1, 1]} : vector<5x32xf32> to vector<5x8xf32>
    %48 = vector.extract_strided_slice %42 {offsets = [0, 0], sizes = [5, 8], strides = [1, 1]} : vector<5x32xf32> to vector<5x8xf32>
    %cst_25 = arith.constant dense<0.000000e+00> : vector<5x5xf32>
    %49 = tpu.matmul %46, %47, %cst_25 {dimension_numbers = #tpu.dot_dimension_numbers<[1], [1], [0], [0], [0, 0, 1, 0], [], []>} : vector<5x8xf32>, vector<5x8xf32>, vector<5x5xf32> -> vector<5x5xf32>
    %cst_26 = arith.constant dense<0xFF800000> : vector<5xf32>
    %50 = vector.multi_reduction <maximumf>, %49, %cst_26 [1] : vector<5x5xf32> to vector<5xf32>
    %51 = vector.shape_cast %50 : vector<5xf32> to vector<5x1xf32>
    %52 = vector.broadcast %51 : vector<5x1xf32> to vector<5x5xf32>
    %53 = arith.subf %49, %52 : vector<5x5xf32>
    %54 = math.exp %53 : vector<5x5xf32>
    %cst_27 = arith.constant dense<0.000000e+00> : vector<5xf32>
    %55 = vector.multi_reduction <add>, %54, %cst_27 [1] : vector<5x5xf32> to vector<5xf32>
    %56 = vector.shape_cast %55 : vector<5xf32> to vector<5x1xf32>
    %57 = tpu.reciprocal %56 {approx = true} : vector<5x1xf32> -> vector<5x1xf32>
    %58 = vector.broadcast %57 : vector<5x1xf32> to vector<5x5xf32>
    %59 = arith.mulf %54, %58 : vector<5x5xf32>
    %cst_28 = arith.constant dense<0.000000e+00> : vector<5x8xf32>
    %60 = tpu.matmul %59, %48, %cst_28 {dimension_numbers = #tpu.dot_dimension_numbers<[1], [0], [0], [1], [0, 0, 1, 1], [], []>} : vector<5x5xf32>, vector<5x8xf32>, vector<5x8xf32> -> vector<5x8xf32>
    %61 = vector.extract_strided_slice %44 {offsets = [0, 0], sizes = [8, 32], strides = [1, 1]} : vector<32x32xf32> to vector<8x32xf32>
    %cst_29 = arith.constant dense<0.000000e+00> : vector<5x32xf32>
    %62 = tpu.matmul %60, %61, %cst_29 {dimension_numbers = #tpu.dot_dimension_numbers<[1], [0], [0], [1], [0, 0, 1, 1], [], []>} : vector<5x8xf32>, vector<8x32xf32>, vector<5x32xf32> -> vector<5x32xf32>
    %63 = arith.addf %45, %62 : vector<5x32xf32>
    %64 = vector.extract_strided_slice %40 {offsets = [0, 8], sizes = [5, 8], strides = [1, 1]} : vector<5x32xf32> to vector<5x8xf32>
    %65 = vector.extract_strided_slice %41 {offsets = [0, 8], sizes = [5, 8], strides = [1, 1]} : vector<5x32xf32> to vector<5x8xf32>
    %66 = vector.extract_strided_slice %42 {offsets = [0, 8], sizes = [5, 8], strides = [1, 1]} : vector<5x32xf32> to vector<5x8xf32>
    %cst_30 = arith.constant dense<0.000000e+00> : vector<5x5xf32>
    %67 = tpu.matmul %64, %65, %cst_30 {dimension_numbers = #tpu.dot_dimension_numbers<[1], [1], [0], [0], [0, 0, 1, 0], [], []>} : vector<5x8xf32>, vector<5x8xf32>, vector<5x5xf32> -> vector<5x5xf32>
    %cst_31 = arith.constant dense<0xFF800000> : vector<5xf32>
    %68 = vector.multi_reduction <maximumf>, %67, %cst_31 [1] : vector<5x5xf32> to vector<5xf32>
    %69 = vector.shape_cast %68 : vector<5xf32> to vector<5x1xf32>
    %70 = vector.broadcast %69 : vector<5x1xf32> to vector<5x5xf32>
    %71 = arith.subf %67, %70 : vector<5x5xf32>
    %72 = math.exp %71 : vector<5x5xf32>
    %cst_32 = arith.constant dense<0.000000e+00> : vector<5xf32>
    %73 = vector.multi_reduction <add>, %72, %cst_32 [1] : vector<5x5xf32> to vector<5xf32>
    %74 = vector.shape_cast %73 : vector<5xf32> to vector<5x1xf32>
    %75 = tpu.reciprocal %74 {approx = true} : vector<5x1xf32> -> vector<5x1xf32>
    %76 = vector.broadcast %75 : vector<5x1xf32> to vector<5x5xf32>
    %77 = arith.mulf %72, %76 : vector<5x5xf32>
    %cst_33 = arith.constant dense<0.000000e+00> : vector<5x8xf32>
    %78 = tpu.matmul %77, %66, %cst_33 {dimension_numbers = #tpu.dot_dimension_numbers<[1], [0], [0], [1], [0, 0, 1, 1], [], []>} : vector<5x5xf32>, vector<5x8xf32>, vector<5x8xf32> -> vector<5x8xf32>
    %79 = vector.extract_strided_slice %44 {offsets = [8, 0], sizes = [8, 32], strides = [1, 1]} : vector<32x32xf32> to vector<8x32xf32>
    %cst_34 = arith.constant dense<0.000000e+00> : vector<5x32xf32>
    %80 = tpu.matmul %78, %79, %cst_34 {dimension_numbers = #tpu.dot_dimension_numbers<[1], [0], [0], [1], [0, 0, 1, 1], [], []>} : vector<5x8xf32>, vector<8x32xf32>, vector<5x32xf32> -> vector<5x32xf32>
    %81 = arith.addf %63, %80 : vector<5x32xf32>
    %82 = vector.extract_strided_slice %40 {offsets = [0, 16], sizes = [5, 8], strides = [1, 1]} : vector<5x32xf32> to vector<5x8xf32>
    %83 = vector.extract_strided_slice %41 {offsets = [0, 16], sizes = [5, 8], strides = [1, 1]} : vector<5x32xf32> to vector<5x8xf32>
    %84 = vector.extract_strided_slice %42 {offsets = [0, 16], sizes = [5, 8], strides = [1, 1]} : vector<5x32xf32> to vector<5x8xf32>
    %cst_35 = arith.constant dense<0.000000e+00> : vector<5x5xf32>
    %85 = tpu.matmul %82, %83, %cst_35 {dimension_numbers = #tpu.dot_dimension_numbers<[1], [1], [0], [0], [0, 0, 1, 0], [], []>} : vector<5x8xf32>, vector<5x8xf32>, vector<5x5xf32> -> vector<5x5xf32>
    %cst_36 = arith.constant dense<0xFF800000> : vector<5xf32>
    %86 = vector.multi_reduction <maximumf>, %85, %cst_36 [1] : vector<5x5xf32> to vector<5xf32>
    %87 = vector.shape_cast %86 : vector<5xf32> to vector<5x1xf32>
    %88 = vector.broadcast %87 : vector<5x1xf32> to vector<5x5xf32>
    %89 = arith.subf %85, %88 : vector<5x5xf32>
    %90 = math.exp %89 : vector<5x5xf32>
    %cst_37 = arith.constant dense<0.000000e+00> : vector<5xf32>
    %91 = vector.multi_reduction <add>, %90, %cst_37 [1] : vector<5x5xf32> to vector<5xf32>
    %92 = vector.shape_cast %91 : vector<5xf32> to vector<5x1xf32>
    %93 = tpu.reciprocal %92 {approx = true} : vector<5x1xf32> -> vector<5x1xf32>
    %94 = vector.broadcast %93 : vector<5x1xf32> to vector<5x5xf32>
    %95 = arith.mulf %90, %94 : vector<5x5xf32>
    %cst_38 = arith.constant dense<0.000000e+00> : vector<5x8xf32>
    %96 = tpu.matmul %95, %84, %cst_38 {dimension_numbers = #tpu.dot_dimension_numbers<[1], [0], [0], [1], [0, 0, 1, 1], [], []>} : vector<5x5xf32>, vector<5x8xf32>, vector<5x8xf32> -> vector<5x8xf32>
    %97 = vector.extract_strided_slice %44 {offsets = [16, 0], sizes = [8, 32], strides = [1, 1]} : vector<32x32xf32> to vector<8x32xf32>
    %cst_39 = arith.constant dense<0.000000e+00> : vector<5x32xf32>
    %98 = tpu.matmul %96, %97, %cst_39 {dimension_numbers = #tpu.dot_dimension_numbers<[1], [0], [0], [1], [0, 0, 1, 1], [], []>} : vector<5x8xf32>, vector<8x32xf32>, vector<5x32xf32> -> vector<5x32xf32>
    %99 = arith.addf %81, %98 : vector<5x32xf32>
    %100 = vector.extract_strided_slice %40 {offsets = [0, 24], sizes = [5, 8], strides = [1, 1]} : vector<5x32xf32> to vector<5x8xf32>
    %101 = vector.extract_strided_slice %41 {offsets = [0, 24], sizes = [5, 8], strides = [1, 1]} : vector<5x32xf32> to vector<5x8xf32>
    %102 = vector.extract_strided_slice %42 {offsets = [0, 24], sizes = [5, 8], strides = [1, 1]} : vector<5x32xf32> to vector<5x8xf32>
    %cst_40 = arith.constant dense<0.000000e+00> : vector<5x5xf32>
    %103 = tpu.matmul %100, %101, %cst_40 {dimension_numbers = #tpu.dot_dimension_numbers<[1], [1], [0], [0], [0, 0, 1, 0], [], []>} : vector<5x8xf32>, vector<5x8xf32>, vector<5x5xf32> -> vector<5x5xf32>
    %cst_41 = arith.constant dense<0xFF800000> : vector<5xf32>
    %104 = vector.multi_reduction <maximumf>, %103, %cst_41 [1] : vector<5x5xf32> to vector<5xf32>
    %105 = vector.shape_cast %104 : vector<5xf32> to vector<5x1xf32>
    %106 = vector.broadcast %105 : vector<5x1xf32> to vector<5x5xf32>
    %107 = arith.subf %103, %106 : vector<5x5xf32>
    %108 = math.exp %107 : vector<5x5xf32>
    %cst_42 = arith.constant dense<0.000000e+00> : vector<5xf32>
    %109 = vector.multi_reduction <add>, %108, %cst_42 [1] : vector<5x5xf32> to vector<5xf32>
    %110 = vector.shape_cast %109 : vector<5xf32> to vector<5x1xf32>
    %111 = tpu.reciprocal %110 {approx = true} : vector<5x1xf32> -> vector<5x1xf32>
    %112 = vector.broadcast %111 : vector<5x1xf32> to vector<5x5xf32>
    %113 = arith.mulf %108, %112 : vector<5x5xf32>
    %cst_43 = arith.constant dense<0.000000e+00> : vector<5x8xf32>
    %114 = tpu.matmul %113, %102, %cst_43 {dimension_numbers = #tpu.dot_dimension_numbers<[1], [0], [0], [1], [0, 0, 1, 1], [], []>} : vector<5x5xf32>, vector<5x8xf32>, vector<5x8xf32> -> vector<5x8xf32>
    %115 = vector.extract_strided_slice %44 {offsets = [24, 0], sizes = [8, 32], strides = [1, 1]} : vector<32x32xf32> to vector<8x32xf32>
    %cst_44 = arith.constant dense<0.000000e+00> : vector<5x32xf32>
    %116 = tpu.matmul %114, %115, %cst_44 {dimension_numbers = #tpu.dot_dimension_numbers<[1], [0], [0], [1], [0, 0, 1, 1], [], []>} : vector<5x8xf32>, vector<8x32xf32>, vector<5x32xf32> -> vector<5x32xf32>
    %117 = arith.addf %99, %116 : vector<5x32xf32>
    %118 = arith.addf %4, %117 : vector<5x32xf32>
    %c0_45 = arith.constant 0 : index
    %c0_46 = arith.constant 0 : index
    %c0_47 = arith.constant 0 : index
    %119 = vector.load %arg12[%c0_45, %c0_46, %c0_47] : memref<1x1x32xf32, #tpu.memory_space<vmem>>, vector<1x1x32xf32>
    %120 = vector.shape_cast %119 : vector<1x1x32xf32> to vector<1x32xf32>
    %121 = vector.broadcast %120 : vector<1x32xf32> to vector<5x32xf32>
    %122 = arith.addf %118, %121 : vector<5x32xf32>
    %c0_48 = arith.constant 0 : index
    %c0_49 = arith.constant 0 : index
    %c0_50 = arith.constant 0 : index
    %123 = vector.load %arg13[%c0_48, %c0_49, %c0_50] : memref<1x1x32xf32, #tpu.memory_space<vmem>>, vector<1x1x32xf32>
    %124 = vector.shape_cast %123 : vector<1x1x32xf32> to vector<1x32xf32>
    %c0_51 = arith.constant 0 : index
    %c0_52 = arith.constant 0 : index
    %c0_53 = arith.constant 0 : index
    %125 = vector.load %arg14[%c0_51, %c0_52, %c0_53] : memref<1x1x32xf32, #tpu.memory_space<vmem>>, vector<1x1x32xf32>
    %126 = vector.shape_cast %125 : vector<1x1x32xf32> to vector<1x32xf32>
    %cst_54 = arith.constant dense<0.000000e+00> : vector<5xf32>
    %127 = vector.multi_reduction <add>, %122, %cst_54 [1] : vector<5x32xf32> to vector<5xf32>
    %128 = vector.shape_cast %127 : vector<5xf32> to vector<5x1xf32>
    %cst_55 = arith.constant 3.200000e+01 : f32
    %129 = vector.broadcast %cst_55 : f32 to vector<5x1xf32>
    %130 = arith.divf %128, %129 : vector<5x1xf32>
    %131 = vector.broadcast %130 : vector<5x1xf32> to vector<5x32xf32>
    %132 = arith.subf %122, %131 : vector<5x32xf32>
    %133 = arith.mulf %132, %132 : vector<5x32xf32>
    %cst_56 = arith.constant dense<0.000000e+00> : vector<5xf32>
    %134 = vector.multi_reduction <add>, %133, %cst_56 [1] : vector<5x32xf32> to vector<5xf32>
    %135 = vector.shape_cast %134 : vector<5xf32> to vector<5x1xf32>
    %cst_57 = arith.constant 3.200000e+01 : f32
    %136 = vector.broadcast %cst_57 : f32 to vector<5x1xf32>
    %137 = arith.divf %135, %136 : vector<5x1xf32>
    %138 = vector.broadcast %130 : vector<5x1xf32> to vector<5x32xf32>
    %139 = arith.subf %122, %138 : vector<5x32xf32>
    %cst_58 = arith.constant 9.99999974E-6 : f32
    %140 = vector.broadcast %cst_58 : f32 to vector<5x1xf32>
    %141 = arith.addf %137, %140 : vector<5x1xf32>
    %142 = math.rsqrt %141 : vector<5x1xf32>
    %143 = vector.broadcast %142 : vector<5x1xf32> to vector<5x32xf32>
    %144 = arith.mulf %139, %143 : vector<5x32xf32>
    %145 = vector.broadcast %124 : vector<1x32xf32> to vector<5x32xf32>
    %146 = arith.mulf %144, %145 : vector<5x32xf32>
    %147 = vector.broadcast %126 : vector<1x32xf32> to vector<5x32xf32>
    %148 = arith.addf %146, %147 : vector<5x32xf32>
    %c0_59 = arith.constant 0 : index
    %c0_60 = arith.constant 0 : index
    %c0_61 = arith.constant 0 : index
    %149 = vector.load %arg15[%c0_59, %c0_60, %c0_61] : memref<1x32x64xf32, #tpu.memory_space<vmem>>, vector<1x32x64xf32>
    %150 = vector.shape_cast %149 : vector<1x32x64xf32> to vector<32x64xf32>
    %cst_62 = arith.constant dense<0.000000e+00> : vector<5x64xf32>
    %151 = tpu.matmul %148, %150, %cst_62 {dimension_numbers = #tpu.dot_dimension_numbers<[1], [0], [0], [1], [0, 0, 1, 1], [], []>} : vector<5x32xf32>, vector<32x64xf32>, vector<5x64xf32> -> vector<5x64xf32>
    %c0_63 = arith.constant 0 : index
    %c0_64 = arith.constant 0 : index
    %c0_65 = arith.constant 0 : index
    %152 = vector.load %arg16[%c0_63, %c0_64, %c0_65] : memref<1x1x64xf32, #tpu.memory_space<vmem>>, vector<1x1x64xf32>
    %153 = vector.shape_cast %152 : vector<1x1x64xf32> to vector<1x64xf32>
    %154 = vector.broadcast %153 : vector<1x64xf32> to vector<5x64xf32>
    %155 = arith.addf %151, %154 : vector<5x64xf32>
    %cst_66 = arith.constant 5.000000e-01 : f32
    %156 = vector.broadcast %cst_66 : f32 to vector<5x64xf32>
    %157 = arith.mulf %156, %155 : vector<5x64xf32>
    %cst_67 = arith.constant 4.471500e-02 : f32
    %158 = vector.broadcast %cst_67 : f32 to vector<5x64xf32>
    %159 = arith.mulf %158, %155 : vector<5x64xf32>
    %160 = arith.mulf %159, %155 : vector<5x64xf32>
    %161 = arith.mulf %160, %155 : vector<5x64xf32>
    %162 = arith.addf %155, %161 : vector<5x64xf32>
    %cst_68 = arith.constant 0.797884583 : f32
    %163 = vector.broadcast %cst_68 : f32 to vector<5x64xf32>
    %164 = arith.mulf %163, %162 : vector<5x64xf32>
    %165 = math.tanh %164 : vector<5x64xf32>
    %cst_69 = arith.constant 1.000000e+00 : f32
    %166 = vector.broadcast %cst_69 : f32 to vector<5x64xf32>
    %167 = arith.addf %166, %165 : vector<5x64xf32>
    %168 = arith.mulf %157, %167 : vector<5x64xf32>
    %c0_70 = arith.constant 0 : index
    %c0_71 = arith.constant 0 : index
    %c0_72 = arith.constant 0 : index
    %169 = vector.load %arg17[%c0_70, %c0_71, %c0_72] : memref<1x64x32xf32, #tpu.memory_space<vmem>>, vector<1x64x32xf32>
    %170 = vector.shape_cast %169 : vector<1x64x32xf32> to vector<64x32xf32>
    %cst_73 = arith.constant dense<0.000000e+00> : vector<5x32xf32>
    %171 = tpu.matmul %168, %170, %cst_73 {dimension_numbers = #tpu.dot_dimension_numbers<[1], [0], [0], [1], [0, 0, 1, 1], [], []>} : vector<5x64xf32>, vector<64x32xf32>, vector<5x32xf32> -> vector<5x32xf32>
    %c0_74 = arith.constant 0 : index
    %c0_75 = arith.constant 0 : index
    %c0_76 = arith.constant 0 : index
    %172 = vector.load %arg18[%c0_74, %c0_75, %c0_76] : memref<1x1x32xf32, #tpu.memory_space<vmem>>, vector<1x1x32xf32>
    %173 = vector.shape_cast %172 : vector<1x1x32xf32> to vector<1x32xf32>
    %174 = vector.broadcast %173 : vector<1x32xf32> to vector<5x32xf32>
    %175 = arith.addf %171, %174 : vector<5x32xf32>
    %176 = arith.addf %122, %175 : vector<5x32xf32>
    %c0_77 = arith.constant 0 : index
    %c0_78 = arith.constant 0 : index
    %c0_79 = arith.constant 0 : index
    %177 = vector.load %arg19[%c0_77, %c0_78, %c0_79] : memref<1x5x32xf32, #tpu.memory_space<vmem>>, vector<1x5x32xf32>
    %178 = vector.shape_cast %177 : vector<1x5x32xf32> to vector<5x32xf32>
    %179 = vector.shape_cast %176 : vector<5x32xf32> to vector<1x5x32xf32>
    tpu.vector_store %arg19[%c0_77, %c0_78, %c0_79], %179 {strides = array<i32>} : memref<1x5x32xf32, #tpu.memory_space<vmem>>, vector<1x5x32xf32>,
    return
  }
  func.func @transform_0(%arg0: i32, %arg1: i32) -> (i32, i32, i32) {
    %c0_i32 = arith.constant 0 : i32
    %c0_i32_0 = arith.constant 0 : i32
    %c0_i32_1 = arith.constant 0 : i32
    return %arg0, %c0_i32, %c0_i32_0 : i32, i32, i32
  }
  func.func @transform_1(%arg0: i32, %arg1: i32) -> (i32, i32) {
    %c0_i32 = arith.constant 0 : i32
    %c0_i32_0 = arith.constant 0 : i32
    %c0_i32_1 = arith.constant 0 : i32
    return %c0_i32, %c0_i32_0 : i32, i32
  }
  func.func @transform_2(%arg0: i32, %arg1: i32) -> (i32, i32) {
    %c0_i32 = arith.constant 0 : i32
    %c0_i32_0 = arith.constant 0 : i32
    %c0_i32_1 = arith.constant 0 : i32
    return %c0_i32, %c0_i32_0 : i32, i32
  }
  func.func @transform_3(%arg0: i32, %arg1: i32) -> (i32, i32) {
    %c0_i32 = arith.constant 0 : i32
    %c0_i32_0 = arith.constant 0 : i32
    %c0_i32_1 = arith.constant 0 : i32
    return %c0_i32, %c0_i32_0 : i32, i32
  }
  func.func @transform_4(%arg0: i32, %arg1: i32) -> (i32, i32) {
    %c0_i32 = arith.constant 0 : i32
    %c0_i32_0 = arith.constant 0 : i32
    %c0_i32_1 = arith.constant 0 : i32
    return %c0_i32, %c0_i32_0 : i32, i32
  }
  func.func @transform_5(%arg0: i32, %arg1: i32) -> (i32, i32, i32) {
    %c0_i32 = arith.constant 0 : i32
    %c0_i32_0 = arith.constant 0 : i32
    %c0_i32_1 = arith.constant 0 : i32
    return %arg1, %c0_i32, %c0_i32_0 : i32, i32, i32
  }
  func.func @transform_6(%arg0: i32, %arg1: i32) -> (i32, i32, i32) {
    %c0_i32 = arith.constant 0 : i32
    %c0_i32_0 = arith.constant 0 : i32
    %c0_i32_1 = arith.constant 0 : i32
    return %arg1, %c0_i32, %c0_i32_0 : i32, i32, i32
  }
  func.func @transform_7(%arg0: i32, %arg1: i32) -> (i32, i32, i32) {
    %c0_i32 = arith.constant 0 : i32
    %c0_i32_0 = arith.constant 0 : i32
    %c0_i32_1 = arith.constant 0 : i32
    return %arg1, %c0_i32, %c0_i32_0 : i32, i32, i32
  }
  func.func @transform_8(%arg0: i32, %arg1: i32) -> (i32, i32, i32) {
    %c0_i32 = arith.constant 0 : i32
    %c0_i32_0 = arith.constant 0 : i32
    %c0_i32_1 = arith.constant 0 : i32
    return %arg1, %c0_i32, %c0_i32_0 : i32, i32, i32
  }
  func.func @transform_9(%arg0: i32, %arg1: i32) -> (i32, i32, i32) {
    %c0_i32 = arith.constant 0 : i32
    %c0_i32_0 = arith.constant 0 : i32
    %c0_i32_1 = arith.constant 0 : i32
    return %arg1, %c0_i32, %c0_i32_0 : i32, i32, i32
  }
  func.func @transform_10(%arg0: i32, %arg1: i32) -> (i32, i32, i32) {
    %c0_i32 = arith.constant 0 : i32
    %c0_i32_0 = arith.constant 0 : i32
    %c0_i32_1 = arith.constant 0 : i32
    return %arg1, %c0_i32, %c0_i32_0 : i32, i32, i32
  }
  func.func @transform_11(%arg0: i32, %arg1: i32) -> (i32, i32, i32) {
    %c0_i32 = arith.constant 0 : i32
    %c0_i32_0 = arith.constant 0 : i32
    %c0_i32_1 = arith.constant 0 : i32
    return %arg1, %c0_i32, %c0_i32_0 : i32, i32, i32
  }
  func.func @transform_12(%arg0: i32, %arg1: i32) -> (i32, i32, i32) {
    %c0_i32 = arith.constant 0 : i32
    %c0_i32_0 = arith.constant 0 : i32
    %c0_i32_1 = arith.constant 0 : i32
    return %arg1, %c0_i32, %c0_i32_0 : i32, i32, i32
  }
  func.func @transform_13(%arg0: i32, %arg1: i32) -> (i32, i32, i32) {
    %c0_i32 = arith.constant 0 : i32
    %c0_i32_0 = arith.constant 0 : i32
    %c0_i32_1 = arith.constant 0 : i32
    return %arg1, %c0_i32, %c0_i32_0 : i32, i32, i32
  }
  func.func @transform_14(%arg0: i32, %arg1: i32) -> (i32, i32, i32) {
    %c0_i32 = arith.constant 0 : i32
    %c0_i32_0 = arith.constant 0 : i32
    %c0_i32_1 = arith.constant 0 : i32
    return %arg1, %c0_i32, %c0_i32_0 : i32, i32, i32
  }
  func.func @transform_15(%arg0: i32, %arg1: i32) -> (i32, i32, i32) {
    %c0_i32 = arith.constant 0 : i32
    %c0_i32_0 = arith.constant 0 : i32
    %c0_i32_1 = arith.constant 0 : i32
    return %arg1, %c0_i32, %c0_i32_0 : i32, i32, i32
  }
  func.func @transform_16(%arg0: i32, %arg1: i32) -> (i32, i32, i32) {
    %c0_i32 = arith.constant 0 : i32
    %c0_i32_0 = arith.constant 0 : i32
    %c0_i32_1 = arith.constant 0 : i32
    return %arg1, %c0_i32, %c0_i32_0 : i32, i32, i32
  }
  func.func @transform_17(%arg0: i32, %arg1: i32) -> (i32, i32, i32) {
    %c0_i32 = arith.constant 0 : i32
    %c0_i32_0 = arith.constant 0 : i32
    %c0_i32_1 = arith.constant 0 : i32
    return %arg0, %c0_i32, %c0_i32_0 : i32, i32, i32
  }
}

</mosaic_0001>

<llo_original>
// kernel: tpu_custom_call.1
$region0: #{tpu_custom_call.1}
  #allocation0 [shape = 'u32[]', space=smem, size = 0x4, offset = 0x4, fixed_abs, tag = 'smem constant byte address 0x4 - core index']
  #allocation1 [shape = 'u32[144,128]{1,0:T(1,128)}', space=vmem, size = 0x12000, scoped, tag = 'internal scratch']
  %s0 = inlined_call_operand.vmem [shape: f32[2,5,192], index: 0, kind: input, shape index: {}]
  %s1 = inlined_call_operand.vmem [shape: f32[5,32], index: 1, kind: input, shape index: {}]
  %s2 = inlined_call_operand.vmem [shape: f32[192,32], index: 2, kind: input, shape index: {}]
  %s3 = inlined_call_operand.vmem [shape: f32[1,32], index: 3, kind: input, shape index: {}]
  %s4 = inlined_call_operand.vmem [shape: f32[1,32], index: 4, kind: input, shape index: {}]
  %s5 = inlined_call_operand.vmem [shape: f32[2,1,32], index: 5, kind: input, shape index: {}]
  %s6 = inlined_call_operand.vmem [shape: f32[2,1,32], index: 6, kind: input, shape index: {}]
  %s7 = inlined_call_operand.vmem [shape: f32[2,32,96], index: 7, kind: input, shape index: {}]
  %s8 = inlined_call_operand.vmem [shape: f32[2,1,96], index: 8, kind: input, shape index: {}]
  %s9 = inlined_call_operand.vmem [shape: f32[2,32,32], index: 9, kind: input, shape index: {}]
  %s10 = inlined_call_operand.vmem [shape: f32[2,1,32], index: 10, kind: input, shape index: {}]
  %s11 = inlined_call_operand.vmem [shape: f32[2,1,32], index: 11, kind: input, shape index: {}]
  %s12 = inlined_call_operand.vmem [shape: f32[2,1,32], index: 12, kind: input, shape index: {}]
  %s13 = inlined_call_operand.vmem [shape: f32[2,32,64], index: 13, kind: input, shape index: {}]
  %s14 = inlined_call_operand.vmem [shape: f32[2,1,64], index: 14, kind: input, shape index: {}]
  %s15 = inlined_call_operand.vmem [shape: f32[2,64,32], index: 15, kind: input, shape index: {}]
  %s16 = inlined_call_operand.vmem [shape: f32[2,1,32], index: 16, kind: input, shape index: {}]
  %s17 = inlined_call_operand.vmem [shape: f32[2,5,32], index: 17, kind: output, shape index: {}]
  %s18 = sld [smem:[#allocation0]]
  $region105: #{tpu_custom_call.1} parent=0
    _
  %s20 = ssub.s32 1, %s18
  %s21 = scalar_select 0, %s20, %s18
  loop: start=0, step=1, limit=6
  $region2: #{tpu_custom_call.1} parent=0 // loop_pre_header
    _
  $region3: #{tpu_custom_call.1} parent=0 // loop_header
    %s23 = sphi 0, %s27
    %p24 = scmp.ge.s32.totalorder %s23, 6
    %s30 = sphi 0, %s42
    %s31 = sphi 0, %s38
    %s32 = sphi 0, %s30
    %s33 = sphi 0, %s31
    %s34 = sphi 0, %s32
    %s35 = sphi 0, %s33
    %s45 = sphi 0, %s47
    %s48 = sphi 0, %s45
    %s49 = sphi 0, %s48
    %s65 = sphi 0, %s49
    %s69 = sphi 0, %s69
    %s71 = sphi 0, %s69
    %s72 = sphi 0, %s71
    %s86 = sphi 0, %s72
    %s90 = sphi 0, %s90
    %s92 = sphi 0, %s90
    %s93 = sphi 0, %s92
    %s107 = sphi 0, %s93
    %s111 = sphi 0, %s111
    %s113 = sphi 0, %s111
    %s114 = sphi 0, %s113
    %s128 = sphi 0, %s114
    %s132 = sphi 0, %s132
    %s134 = sphi 0, %s132
    %s135 = sphi 0, %s134
    %s149 = sphi 0, %s135
    %s155 = sphi 0, %s157
    %s158 = sphi 0, %s155
    %s159 = sphi 0, %s158
    %s175 = sphi 0, %s159
    %s181 = sphi 0, %s183
    %s184 = sphi 0, %s181
    %s185 = sphi 0, %s184
    %s201 = sphi 0, %s185
    %s207 = sphi 0, %s209
    %s210 = sphi 0, %s207
    %s211 = sphi 0, %s210
    %s227 = sphi 0, %s211
    %s233 = sphi 0, %s235
    %s236 = sphi 0, %s233
    %s237 = sphi 0, %s236
    %s253 = sphi 0, %s237
    %s259 = sphi 0, %s261
    %s262 = sphi 0, %s259
    %s263 = sphi 0, %s262
    %s279 = sphi 0, %s263
    %s285 = sphi 0, %s287
    %s288 = sphi 0, %s285
    %s289 = sphi 0, %s288
    %s305 = sphi 0, %s289
    %s311 = sphi 0, %s313
    %s314 = sphi 0, %s311
    %s315 = sphi 0, %s314
    %s331 = sphi 0, %s315
    %s337 = sphi 0, %s339
    %s340 = sphi 0, %s337
    %s341 = sphi 0, %s340
    %s357 = sphi 0, %s341
    %s363 = sphi 0, %s365
    %s366 = sphi 0, %s363
    %s367 = sphi 0, %s366
    %s383 = sphi 0, %s367
    %s389 = sphi 0, %s391
    %s392 = sphi 0, %s389
    %s393 = sphi 0, %s392
    %s409 = sphi 0, %s393
    %s415 = sphi 0, %s417
    %s418 = sphi 0, %s415
    %s419 = sphi 0, %s418
    %s435 = sphi 0, %s419
    %s441 = sphi 0, %s443
    %s444 = sphi 0, %s441
    %s445 = sphi 0, %s444
    %s461 = sphi 0, %s445
    %s467 = sphi 0, %s469
    %s470 = sphi 0, %s467
    %s471 = sphi 0, %s470
    %s487 = sphi 0, %s471
  $region4: #{tpu_custom_call.1} parent=0 // loop_header_branch
    %26 = sbr.rel (%p24) target = $region8
  $region5: #{tpu_custom_call.1} parent=0 // loop_body
    %s28 = ssub.s32 %s23, 1
    %s29 = ssub.s32 %s23, 2
    %s36 = sadd.s32 1, %s31
    %p37 = scmp.ge.s32.totalorder %s36, 2
    %s38 = scalar_select %p37, 0, %s36
    %s39 = sadd.s32 1, %s30
    %s40 = scalar_select %p37, %s39, %s30
    %p41 = scmp.ge.s32.totalorder %s40, 2
    %s42 = scalar_select %p41, 0, %s40
    %s43 = ssub.s32 %s30, %s42
    %p44 = scmp.eq.s32.totalorder %s43, 0
    %s46 = sadd.s32 %s45, 1
    %s47 = scalar_select %p44, %s45, %s46
    %p50 = pneg %p44
    %p51 = scmp.eq.s32.totalorder %s23, 3
    %p52 = por %p50, %p51
    %p53 = scmp.ne.s32.totalorder %s45, %s48
    %p54 = scmp.eq.s32.totalorder %s23, 0
    %p55 = por %p53, %p54
    %p56 = scmp.ne.s32.totalorder %s45, %s48
    %p57 = scmp.eq.s32.totalorder %s28, 3
    %p58 = por %p56, %p57
    %p59 = scmp.ne.s32.totalorder %s48, %s49
    %p60 = scmp.eq.s32.totalorder %s28, 0
    %p61 = por %p59, %p60
    %p62 = scmp.ne.s32.totalorder %s48, %s49
    %p63 = scmp.eq.s32.totalorder %s29, 3
    %p64 = por %p62, %p63
    %p66 = scmp.ne.s32.totalorder %s49, %s65
    %p67 = scmp.eq.s32.totalorder %s29, 0
    %p68 = por %p66, %p67
    %s70 = sadd.s32 %s69, 1
    %p73 = scmp.eq.s32.totalorder %s23, 3
    %p74 = scmp.ne.s32.totalorder %s69, %s71
    %p75 = scmp.eq.s32.totalorder %s23, 0
    %p76 = por %p74, %p75
    %p77 = scmp.ne.s32.totalorder %s69, %s71
    %p78 = scmp.eq.s32.totalorder %s28, 3
    %p79 = por %p77, %p78
    %p80 = scmp.ne.s32.totalorder %s71, %s72
    %p81 = scmp.eq.s32.totalorder %s28, 0
    %p82 = por %p80, %p81
    %p83 = scmp.ne.s32.totalorder %s71, %s72
    %p84 = scmp.eq.s32.totalorder %s29, 3
    %p85 = por %p83, %p84
    %p87 = scmp.ne.s32.totalorder %s72, %s86
    %p88 = scmp.eq.s32.totalorder %s29, 0
    %p89 = por %p87, %p88
    %s91 = sadd.s32 %s90, 1
    %p94 = scmp.eq.s32.totalorder %s23, 3
    %p95 = scmp.ne.s32.totalorder %s90, %s92
    %p96 = scmp.eq.s32.totalorder %s23, 0
    %p97 = por %p95, %p96
    %p98 = scmp.ne.s32.totalorder %s90, %s92
    %p99 = scmp.eq.s32.totalorder %s28, 3
    %p100 = por %p98, %p99
    %p101 = scmp.ne.s32.totalorder %s92, %s93
    %p102 = scmp.eq.s32.totalorder %s28, 0
    %p103 = por %p101, %p102
    %p104 = scmp.ne.s32.totalorder %s92, %s93
    %p105 = scmp.eq.s32.totalorder %s29, 3
    %p106 = por %p104, %p105
    %p108 = scmp.ne.s32.totalorder %s93, %s107
    %p109 = scmp.eq.s32.totalorder %s29, 0
    %p110 = por %p108, %p109
    %s112 = sadd.s32 %s111, 1
    %p115 = scmp.eq.s32.totalorder %s23, 3
    %p116 = scmp.ne.s32.totalorder %s111, %s113
    %p117 = scmp.eq.s32.totalorder %s23, 0
    %p118 = por %p116, %p117
    %p119 = scmp.ne.s32.totalorder %s111, %s113
    %p120 = scmp.eq.s32.totalorder %s28, 3
    %p121 = por %p119, %p120
    %p122 = scmp.ne.s32.totalorder %s113, %s114
    %p123 = scmp.eq.s32.totalorder %s28, 0
    %p124 = por %p122, %p123
    %p125 = scmp.ne.s32.totalorder %s113, %s114
    %p126 = scmp.eq.s32.totalorder %s29, 3
    %p127 = por %p125, %p126
    %p129 = scmp.ne.s32.totalorder %s114, %s128
    %p130 = scmp.eq.s32.totalorder %s29, 0
    %p131 = por %p129, %p130
    %s133 = sadd.s32 %s132, 1
    %p136 = scmp.eq.s32.totalorder %s23, 3
    %p137 = scmp.ne.s32.totalorder %s132, %s134
    %p138 = scmp.eq.s32.totalorder %s23, 0
    %p139 = por %p137, %p138
    %p140 = scmp.ne.s32.totalorder %s132, %s134
    %p141 = scmp.eq.s32.totalorder %s28, 3
    %p142 = por %p140, %p141
    %p143 = scmp.ne.s32.totalorder %s134, %s135
    %p144 = scmp.eq.s32.totalorder %s28, 0
    %p145 = por %p143, %p144
    %p146 = scmp.ne.s32.totalorder %s134, %s135
    %p147 = scmp.eq.s32.totalorder %s29, 3
    %p148 = por %p146, %p147
    %p150 = scmp.ne.s32.totalorder %s135, %s149
    %p151 = scmp.eq.s32.totalorder %s29, 0
    %p152 = por %p150, %p151
    %s153 = ssub.s32 %s31, %s38
    %p154 = scmp.eq.s32.totalorder %s153, 0
    %s156 = sadd.s32 %s155, 1
    %s157 = scalar_select %p154, %s155, %s156
    %p160 = pneg %p154
    %p161 = scmp.eq.s32.totalorder %s23, 3
    %p162 = por %p160, %p161
    %p163 = scmp.ne.s32.totalorder %s155, %s158
    %p164 = scmp.eq.s32.totalorder %s23, 0
    %p165 = por %p163, %p164
    %p166 = scmp.ne.s32.totalorder %s155, %s158
    %p167 = scmp.eq.s32.totalorder %s28, 3
    %p168 = por %p166, %p167
    %p169 = scmp.ne.s32.totalorder %s158, %s159
    %p170 = scmp.eq.s32.totalorder %s28, 0
    %p171 = por %p169, %p170
    %p172 = scmp.ne.s32.totalorder %s158, %s159
    %p173 = scmp.eq.s32.totalorder %s29, 3
    %p174 = por %p172, %p173
    %p176 = scmp.ne.s32.totalorder %s159, %s175
    %p177 = scmp.eq.s32.totalorder %s29, 0
    %p178 = por %p176, %p177
    %s179 = ssub.s32 %s31, %s38
    %p180 = scmp.eq.s32.totalorder %s179, 0
    %s182 = sadd.s32 %s181, 1
    %s183 = scalar_select %p180, %s181, %s182
    %p186 = pneg %p180
    %p187 = scmp.eq.s32.totalorder %s23, 3
    %p188 = por %p186, %p187
    %p189 = scmp.ne.s32.totalorder %s181, %s184
    %p190 = scmp.eq.s32.totalorder %s23, 0
    %p191 = por %p189, %p190
    %p192 = scmp.ne.s32.totalorder %s181, %s184
    %p193 = scmp.eq.s32.totalorder %s28, 3
    %p194 = por %p192, %p193
    %p195 = scmp.ne.s32.totalorder %s184, %s185
    %p196 = scmp.eq.s32.totalorder %s28, 0
    %p197 = por %p195, %p196
    %p198 = scmp.ne.s32.totalorder %s184, %s185
    %p199 = scmp.eq.s32.totalorder %s29, 3
    %p200 = por %p198, %p199
    %p202 = scmp.ne.s32.totalorder %s185, %s201
    %p203 = scmp.eq.s32.totalorder %s29, 0
    %p204 = por %p202, %p203
    %s205 = ssub.s32 %s31, %s38
    %p206 = scmp.eq.s32.totalorder %s205, 0
    %s208 = sadd.s32 %s207, 1
    %s209 = scalar_select %p206, %s207, %s208
    %p212 = pneg %p206
    %p213 = scmp.eq.s32.totalorder %s23, 3
    %p214 = por %p212, %p213
    %p215 = scmp.ne.s32.totalorder %s207, %s210
    %p216 = scmp.eq.s32.totalorder %s23, 0
    %p217 = por %p215, %p216
    %p218 = scmp.ne.s32.totalorder %s207, %s210
    %p219 = scmp.eq.s32.totalorder %s28, 3
    %p220 = por %p218, %p219
    %p221 = scmp.ne.s32.totalorder %s210, %s211
    %p222 = scmp.eq.s32.totalorder %s28, 0
    %p223 = por %p221, %p222
    %p224 = scmp.ne.s32.totalorder %s210, %s211
    %p225 = scmp.eq.s32.totalorder %s29, 3
    %p226 = por %p224, %p225
    %p228 = scmp.ne.s32.totalorder %s211, %s227
    %p229 = scmp.eq.s32.totalorder %s29, 0
    %p230 = por %p228, %p229
    %s231 = ssub.s32 %s31, %s38
    %p232 = scmp.eq.s32.totalorder %s231, 0
    %s234 = sadd.s32 %s233, 1
    %s235 = scalar_select %p232, %s233, %s234
    %p238 = pneg %p232
    %p239 = scmp.eq.s32.totalorder %s23, 3
    %p240 = por %p238, %p239
    %p241 = scmp.ne.s32.totalorder %s233, %s236
    %p242 = scmp.eq.s32.totalorder %s23, 0
    %p243 = por %p241, %p242
    %p244 = scmp.ne.s32.totalorder %s233, %s236
    %p245 = scmp.eq.s32.totalorder %s28, 3
    %p246 = por %p244, %p245
    %p247 = scmp.ne.s32.totalorder %s236, %s237
    %p248 = scmp.eq.s32.totalorder %s28, 0
    %p249 = por %p247, %p248
    %p250 = scmp.ne.s32.totalorder %s236, %s237
    %p251 = scmp.eq.s32.totalorder %s29, 3
    %p252 = por %p250, %p251
    %p254 = scmp.ne.s32.totalorder %s237, %s253
    %p255 = scmp.eq.s32.totalorder %s29, 0
    %p256 = por %p254, %p255
    %s257 = ssub.s32 %s31, %s38
    %p258 = scmp.eq.s32.totalorder %s257, 0
    %s260 = sadd.s32 %s259, 1
    %s261 = scalar_select %p258, %s259, %s260
    %p264 = pneg %p258
    %p265 = scmp.eq.s32.totalorder %s23, 3
    %p266 = por %p264, %p265
    %p267 = scmp.ne.s32.totalorder %s259, %s262
    %p268 = scmp.eq.s32.totalorder %s23, 0
    %p269 = por %p267, %p268
    %p270 = scmp.ne.s32.totalorder %s259, %s262
    %p271 = scmp.eq.s32.totalorder %s28, 3
    %p272 = por %p270, %p271
    %p273 = scmp.ne.s32.totalorder %s262, %s263
    %p274 = scmp.eq.s32.totalorder %s28, 0
    %p275 = por %p273, %p274
    %p276 = scmp.ne.s32.totalorder %s262, %s263
    %p277 = scmp.eq.s32.totalorder %s29, 3
    %p278 = por %p276, %p277
    %p280 = scmp.ne.s32.totalorder %s263, %s279
    %p281 = scmp.eq.s32.totalorder %s29, 0
    %p282 = por %p280, %p281
    %s283 = ssub.s32 %s31, %s38
    %p284 = scmp.eq.s32.totalorder %s283, 0
    %s286 = sadd.s32 %s285, 1
    %s287 = scalar_select %p284, %s285, %s286
    %p290 = pneg %p284
    %p291 = scmp.eq.s32.totalorder %s23, 3
    %p292 = por %p290, %p291
    %p293 = scmp.ne.s32.totalorder %s285, %s288
    %p294 = scmp.eq.s32.totalorder %s23, 0
    %p295 = por %p293, %p294
    %p296 = scmp.ne.s32.totalorder %s285, %s288
    %p297 = scmp.eq.s32.totalorder %s28, 3
    %p298 = por %p296, %p297
    %p299 = scmp.ne.s32.totalorder %s288, %s289
    %p300 = scmp.eq.s32.totalorder %s28, 0
    %p301 = por %p299, %p300
    %p302 = scmp.ne.s32.totalorder %s288, %s289
    %p303 = scmp.eq.s32.totalorder %s29, 3
    %p304 = por %p302, %p303
    %p306 = scmp.ne.s32.totalorder %s289, %s305
    %p307 = scmp.eq.s32.totalorder %s29, 0
    %p308 = por %p306, %p307
    %s309 = ssub.s32 %s31, %s38
    %p310 = scmp.eq.s32.totalorder %s309, 0
    %s312 = sadd.s32 %s311, 1
    %s313 = scalar_select %p310, %s311, %s312
    %p316 = pneg %p310
    %p317 = scmp.eq.s32.totalorder %s23, 3
    %p318 = por %p316, %p317
    %p319 = scmp.ne.s32.totalorder %s311, %s314
    %p320 = scmp.eq.s32.totalorder %s23, 0
    %p321 = por %p319, %p320
    %p322 = scmp.ne.s32.totalorder %s311, %s314
    %p323 = scmp.eq.s32.totalorder %s28, 3
    %p324 = por %p322, %p323
    %p325 = scmp.ne.s32.totalorder %s314, %s315
    %p326 = scmp.eq.s32.totalorder %s28, 0
    %p327 = por %p325, %p326
    %p328 = scmp.ne.s32.totalorder %s314, %s315
    %p329 = scmp.eq.s32.totalorder %s29, 3
    %p330 = por %p328, %p329
    %p332 = scmp.ne.s32.totalorder %s315, %s331
    %p333 = scmp.eq.s32.totalorder %s29, 0
    %p334 = por %p332, %p333
    %s335 = ssub.s32 %s31, %s38
    %p336 = scmp.eq.s32.totalorder %s335, 0
    %s338 = sadd.s32 %s337, 1
    %s339 = scalar_select %p336, %s337, %s338
    %p342 = pneg %p336
    %p343 = scmp.eq.s32.totalorder %s23, 3
    %p344 = por %p342, %p343
    %p345 = scmp.ne.s32.totalorder %s337, %s340
    %p346 = scmp.eq.s32.totalorder %s23, 0
    %p347 = por %p345, %p346
    %p348 = scmp.ne.s32.totalorder %s337, %s340
    %p349 = scmp.eq.s32.totalorder %s28, 3
    %p350 = por %p348, %p349
    %p351 = scmp.ne.s32.totalorder %s340, %s341
    %p352 = scmp.eq.s32.totalorder %s28, 0
    %p353 = por %p351, %p352
    %p354 = scmp.ne.s32.totalorder %s340, %s341
    %p355 = scmp.eq.s32.totalorder %s29, 3
    %p356 = por %p354, %p355
    %p358 = scmp.ne.s32.totalorder %s341, %s357
    %p359 = scmp.eq.s32.totalorder %s29, 0
    %p360 = por %p358, %p359
    %s361 = ssub.s32 %s31, %s38
    %p362 = scmp.eq.s32.totalorder %s361, 0
    %s364 = sadd.s32 %s363, 1
    %s365 = scalar_select %p362, %s363, %s364
    %p368 = pneg %p362
    %p369 = scmp.eq.s32.totalorder %s23, 3
    %p370 = por %p368, %p369
    %p371 = scmp.ne.s32.totalorder %s363, %s366
    %p372 = scmp.eq.s32.totalorder %s23, 0
    %p373 = por %p371, %p372
    %p374 = scmp.ne.s32.totalorder %s363, %s366
    %p375 = scmp.eq.s32.totalorder %s28, 3
    %p376 = por %p374, %p375
    %p377 = scmp.ne.s32.totalorder %s366, %s367
    %p378 = scmp.eq.s32.totalorder %s28, 0
    %p379 = por %p377, %p378
    %p380 = scmp.ne.s32.totalorder %s366, %s367
    %p381 = scmp.eq.s32.totalorder %s29, 3
    %p382 = por %p380, %p381
    %p384 = scmp.ne.s32.totalorder %s367, %s383
    %p385 = scmp.eq.s32.totalorder %s29, 0
    %p386 = por %p384, %p385
    %s387 = ssub.s32 %s31, %s38
    %p388 = scmp.eq.s32.totalorder %s387, 0
    %s390 = sadd.s32 %s389, 1
    %s391 = scalar_select %p388, %s389, %s390
    %p394 = pneg %p388
    %p395 = scmp.eq.s32.totalorder %s23, 3
    %p396 = por %p394, %p395
    %p397 = scmp.ne.s32.totalorder %s389, %s392
    %p398 = scmp.eq.s32.totalorder %s23, 0
    %p399 = por %p397, %p398
    %p400 = scmp.ne.s32.totalorder %s389, %s392
    %p401 = scmp.eq.s32.totalorder %s28, 3
    %p402 = por %p400, %p401
    %p403 = scmp.ne.s32.totalorder %s392, %s393
    %p404 = scmp.eq.s32.totalorder %s28, 0
    %p405 = por %p403, %p404
    %p406 = scmp.ne.s32.totalorder %s392, %s393
    %p407 = scmp.eq.s32.totalorder %s29, 3
    %p408 = por %p406, %p407
    %p410 = scmp.ne.s32.totalorder %s393, %s409
    %p411 = scmp.eq.s32.totalorder %s29, 0
    %p412 = por %p410, %p411
    %s413 = ssub.s32 %s31, %s38
    %p414 = scmp.eq.s32.totalorder %s413, 0
    %s416 = sadd.s32 %s415, 1
    %s417 = scalar_select %p414, %s415, %s416
    %p420 = pneg %p414
    %p421 = scmp.eq.s32.totalorder %s23, 3
    %p422 = por %p420, %p421
    %p423 = scmp.ne.s32.totalorder %s415, %s418
    %p424 = scmp.eq.s32.totalorder %s23, 0
    %p425 = por %p423, %p424
    %p426 = scmp.ne.s32.totalorder %s415, %s418
    %p427 = scmp.eq.s32.totalorder %s28, 3
    %p428 = por %p426, %p427
    %p429 = scmp.ne.s32.totalorder %s418, %s419
    %p430 = scmp.eq.s32.totalorder %s28, 0
    %p431 = por %p429, %p430
    %p432 = scmp.ne.s32.totalorder %s418, %s419
    %p433 = scmp.eq.s32.totalorder %s29, 3
    %p434 = por %p432, %p433
    %p436 = scmp.ne.s32.totalorder %s419, %s435
    %p437 = scmp.eq.s32.totalorder %s29, 0
    %p438 = por %p436, %p437
    %s439 = ssub.s32 %s31, %s38
    %p440 = scmp.eq.s32.totalorder %s439, 0
    %s442 = sadd.s32 %s441, 1
    %s443 = scalar_select %p440, %s441, %s442
    %p446 = pneg %p440
    %p447 = scmp.eq.s32.totalorder %s23, 3
    %p448 = por %p446, %p447
    %p449 = scmp.ne.s32.totalorder %s441, %s444
    %p450 = scmp.eq.s32.totalorder %s23, 0
    %p451 = por %p449, %p450
    %p452 = scmp.ne.s32.totalorder %s441, %s444
    %p453 = scmp.eq.s32.totalorder %s28, 3
    %p454 = por %p452, %p453
    %p455 = scmp.ne.s32.totalorder %s444, %s445
    %p456 = scmp.eq.s32.totalorder %s28, 0
    %p457 = por %p455, %p456
    %p458 = scmp.ne.s32.totalorder %s444, %s445
    %p459 = scmp.eq.s32.totalorder %s29, 3
    %p460 = por %p458, %p459
    %p462 = scmp.ne.s32.totalorder %s445, %s461
    %p463 = scmp.eq.s32.totalorder %s29, 0
    %p464 = por %p462, %p463
    %s465 = ssub.s32 %s30, %s42
    %p466 = scmp.eq.s32.totalorder %s465, 0
    %s468 = sadd.s32 %s467, 1
    %s469 = scalar_select %p466, %s467, %s468
    %p472 = pneg %p466
    %p473 = scmp.eq.s32.totalorder %s23, 3
    %p474 = por %p472, %p473
    %p475 = scmp.ne.s32.totalorder %s467, %s470
    %p476 = scmp.eq.s32.totalorder %s23, 0
    %p477 = por %p475, %p476
    %p478 = scmp.ne.s32.totalorder %s467, %s470
    %p479 = scmp.eq.s32.totalorder %s28, 3
    %p480 = por %p478, %p479
    %p481 = scmp.ne.s32.totalorder %s470, %s471
    %p482 = scmp.eq.s32.totalorder %s28, 0
    %p483 = por %p481, %p482
    %p484 = scmp.ne.s32.totalorder %s470, %s471
    %p485 = scmp.eq.s32.totalorder %s29, 3
    %p486 = por %p484, %p485
    %p488 = scmp.ne.s32.totalorder %s471, %s487
    %p489 = scmp.eq.s32.totalorder %s29, 0
    %p490 = por %p488, %p489
    %p491 = scmp.le.s32.totalorder 1, %s23
    %p492 = scmp.lt.s32.totalorder %s23, 5
    %p493 = pnand %p491, %p492
    %p494 = pneg %p493
    // Predicated region
    $region9: #{tpu_custom_call.1} parent=5 // pred_check
      _
    $region10: #{tpu_custom_call.1} parent=5 // pred_check_branch
      %496 = sbr.rel (%p493) target = $region12
    $region11: #{tpu_custom_call.1} parent=5 // pred_region
      %s497 = ssub.s32 %s23, 1
      // Predicated region
      $region13: #{tpu_custom_call.1} parent=11 // pred_check
        %p498 = pneg %p82
      $region14: #{tpu_custom_call.1} parent=11 // pred_check_branch
        %500 = sbr.rel (%p498) target = $region16
      $region15: #{tpu_custom_call.1} parent=11 // pred_region
        _
      $region16: #{tpu_custom_call.1} parent=11 // pred_fallthru
        _
      // Predicated region
      $region17: #{tpu_custom_call.1} parent=11 // pred_check
        %p501 = pneg %p103
      $region18: #{tpu_custom_call.1} parent=11 // pred_check_branch
        %503 = sbr.rel (%p501) target = $region20
      $region19: #{tpu_custom_call.1} parent=11 // pred_region
        _
      $region20: #{tpu_custom_call.1} parent=11 // pred_fallthru
        _
      // Predicated region
      $region21: #{tpu_custom_call.1} parent=11 // pred_check
        %p504 = pneg %p124
      $region22: #{tpu_custom_call.1} parent=11 // pred_check_branch
        %506 = sbr.rel (%p504) target = $region24
      $region23: #{tpu_custom_call.1} parent=11 // pred_region
        _
      $region24: #{tpu_custom_call.1} parent=11 // pred_fallthru
        _
      // Predicated region
      $region25: #{tpu_custom_call.1} parent=11 // pred_check
        %p507 = pneg %p145
      $region26: #{tpu_custom_call.1} parent=11 // pred_check_branch
        %509 = sbr.rel (%p507) target = $region28
      $region27: #{tpu_custom_call.1} parent=11 // pred_region
        _
      $region28: #{tpu_custom_call.1} parent=11 // pred_fallthru
        _
    $region12: #{tpu_custom_call.1} parent=5 // pred_fallthru
      _
    %p510 = scmp.lt.s32.totalorder %s23, 4
    // Predicated region
    $region29: #{tpu_custom_call.1} parent=5 // pred_check
      %p511 = pneg %p510
    $region30: #{tpu_custom_call.1} parent=5 // pred_check_branch
      %513 = sbr.rel (%p511) target = $region32
    $region31: #{tpu_custom_call.1} parent=5 // pred_region
      // Predicated region
      $region33: #{tpu_custom_call.1} parent=31 // pred_check
        %p514 = pneg %p55
      $region34: #{tpu_custom_call.1} parent=31 // pred_check_branch
        %516 = sbr.rel (%p514) target = $region36
      $region35: #{tpu_custom_call.1} parent=31 // pred_region
        %p517 = scmp.lt.s32.totalorder %s30, 1
        %s518 = scalar_select %p517, %s30, 1
        %s519 = smul.addr %s518, 2
        %s520 = smul.addr %s519, 8
        %s521 = scalar_lea.vmem %s0, %s520
      $region36: #{tpu_custom_call.1} parent=31 // pred_fallthru
        _
      // Predicated region
      $region37: #{tpu_custom_call.1} parent=31 // pred_check
        %p522 = pneg %p165
      $region38: #{tpu_custom_call.1} parent=31 // pred_check_branch
        %524 = sbr.rel (%p522) target = $region40
      $region39: #{tpu_custom_call.1} parent=31 // pred_region
        %p525 = scmp.lt.s32.totalorder %s31, 1
        %s526 = scalar_select %p525, %s31, 1
        %s527 = scalar_lea.vmem %s5, %s526
      $region40: #{tpu_custom_call.1} parent=31 // pred_fallthru
        _
      // Predicated region
      $region41: #{tpu_custom_call.1} parent=31 // pred_check
        %p528 = pneg %p191
      $region42: #{tpu_custom_call.1} parent=31 // pred_check_branch
        %530 = sbr.rel (%p528) target = $region44
      $region43: #{tpu_custom_call.1} parent=31 // pred_region
        %p531 = scmp.lt.s32.totalorder %s31, 1
        %s532 = scalar_select %p531, %s31, 1
        %s533 = scalar_lea.vmem %s6, %s532
      $region44: #{tpu_custom_call.1} parent=31 // pred_fallthru
        _
      // Predicated region
      $region45: #{tpu_custom_call.1} parent=31 // pred_check
        %p534 = pneg %p217
      $region46: #{tpu_custom_call.1} parent=31 // pred_check_branch
        %536 = sbr.rel (%p534) target = $region48
      $region47: #{tpu_custom_call.1} parent=31 // pred_region
        %p537 = scmp.lt.s32.totalorder %s31, 1
        %s538 = scalar_select %p537, %s31, 1
        %s539 = smul.addr %s538, 4
        %s540 = smul.addr %s539, 8
        %s541 = scalar_lea.vmem %s7, %s540
      $region48: #{tpu_custom_call.1} parent=31 // pred_fallthru
        _
      // Predicated region
      $region49: #{tpu_custom_call.1} parent=31 // pred_check
        %p542 = pneg %p243
      $region50: #{tpu_custom_call.1} parent=31 // pred_check_branch
        %544 = sbr.rel (%p542) target = $region52
      $region51: #{tpu_custom_call.1} parent=31 // pred_region
        %p545 = scmp.lt.s32.totalorder %s31, 1
        %s546 = scalar_select %p545, %s31, 1
        %s547 = scalar_lea.vmem %s8, %s546
      $region52: #{tpu_custom_call.1} parent=31 // pred_fallthru
        _
      // Predicated region
      $region53: #{tpu_custom_call.1} parent=31 // pred_check
        %p548 = pneg %p269
      $region54: #{tpu_custom_call.1} parent=31 // pred_check_branch
        %550 = sbr.rel (%p548) target = $region56
      $region55: #{tpu_custom_call.1} parent=31 // pred_region
        %p551 = scmp.lt.s32.totalorder %s31, 1
        %s552 = scalar_select %p551, %s31, 1
        %s553 = smul.addr %s552, 4
        %s554 = smul.addr %s553, 8
        %s555 = scalar_lea.vmem %s9, %s554
      $region56: #{tpu_custom_call.1} parent=31 // pred_fallthru
        _
      // Predicated region
      $region57: #{tpu_custom_call.1} parent=31 // pred_check
        %p556 = pneg %p295
      $region58: #{tpu_custom_call.1} parent=31 // pred_check_branch
        %558 = sbr.rel (%p556) target = $region60
      $region59: #{tpu_custom_call.1} parent=31 // pred_region
        %p559 = scmp.lt.s32.totalorder %s31, 1
        %s560 = scalar_select %p559, %s31, 1
        %s561 = scalar_lea.vmem %s10, %s560
      $region60: #{tpu_custom_call.1} parent=31 // pred_fallthru
        _
      // Predicated region
      $region61: #{tpu_custom_call.1} parent=31 // pred_check
        %p562 = pneg %p321
      $region62: #{tpu_custom_call.1} parent=31 // pred_check_branch
        %564 = sbr.rel (%p562) target = $region64
      $region63: #{tpu_custom_call.1} parent=31 // pred_region
        %p565 = scmp.lt.s32.totalorder %s31, 1
        %s566 = scalar_select %p565, %s31, 1
        %s567 = scalar_lea.vmem %s11, %s566
      $region64: #{tpu_custom_call.1} parent=31 // pred_fallthru
        _
      // Predicated region
      $region65: #{tpu_custom_call.1} parent=31 // pred_check
        %p568 = pneg %p347
      $region66: #{tpu_custom_call.1} parent=31 // pred_check_branch
        %570 = sbr.rel (%p568) target = $region68
      $region67: #{tpu_custom_call.1} parent=31 // pred_region
        %p571 = scmp.lt.s32.totalorder %s31, 1
        %s572 = scalar_select %p571, %s31, 1
        %s573 = scalar_lea.vmem %s12, %s572
      $region68: #{tpu_custom_call.1} parent=31 // pred_fallthru
        _
      // Predicated region
      $region69: #{tpu_custom_call.1} parent=31 // pred_check
        %p574 = pneg %p373
      $region70: #{tpu_custom_call.1} parent=31 // pred_check_branch
        %576 = sbr.rel (%p574) target = $region72
      $region71: #{tpu_custom_call.1} parent=31 // pred_region
        %p577 = scmp.lt.s32.totalorder %s31, 1
        %s578 = scalar_select %p577, %s31, 1
        %s579 = smul.addr %s578, 4
        %s580 = smul.addr %s579, 8
        %s581 = scalar_lea.vmem %s13, %s580
      $region72: #{tpu_custom_call.1} parent=31 // pred_fallthru
        _
      // Predicated region
      $region73: #{tpu_custom_call.1} parent=31 // pred_check
        %p582 = pneg %p399
      $region74: #{tpu_custom_call.1} parent=31 // pred_check_branch
        %584 = sbr.rel (%p582) target = $region76
      $region75: #{tpu_custom_call.1} parent=31 // pred_region
        %p585 = scmp.lt.s32.totalorder %s31, 1
        %s586 = scalar_select %p585, %s31, 1
        %s587 = scalar_lea.vmem %s14, %s586
      $region76: #{tpu_custom_call.1} parent=31 // pred_fallthru
        _
      // Predicated region
      $region77: #{tpu_custom_call.1} parent=31 // pred_check
        %p588 = pneg %p425
      $region78: #{tpu_custom_call.1} parent=31 // pred_check_branch
        %590 = sbr.rel (%p588) target = $region80
      $region79: #{tpu_custom_call.1} parent=31 // pred_region
        %p591 = scmp.lt.s32.totalorder %s31, 1
        %s592 = scalar_select %p591, %s31, 1
        %s593 = smul.addr %s592, 8
        %s594 = smul.addr %s593, 8
        %s595 = scalar_lea.vmem %s15, %s594
      $region80: #{tpu_custom_call.1} parent=31 // pred_fallthru
        _
      // Predicated region
      $region81: #{tpu_custom_call.1} parent=31 // pred_check
        %p596 = pneg %p451
      $region82: #{tpu_custom_call.1} parent=31 // pred_check_branch
        %598 = sbr.rel (%p596) target = $region84
      $region83: #{tpu_custom_call.1} parent=31 // pred_region
        %p599 = scmp.lt.s32.totalorder %s31, 1
        %s600 = scalar_select %p599, %s31, 1
        %s601 = scalar_lea.vmem %s16, %s600
      $region84: #{tpu_custom_call.1} parent=31 // pred_fallthru
        _
    $region32: #{tpu_custom_call.1} parent=5 // pred_fallthru
      _
    %p602 = scmp.le.s32.totalorder 1, %s23
    %p603 = scmp.lt.s32.totalorder %s23, 5
    %p604 = pnand %p602, %p603
    %p605 = pneg %p604
    // Predicated region
    $region85: #{tpu_custom_call.1} parent=5 // pred_check
      _
    $region86: #{tpu_custom_call.1} parent=5 // pred_check_branch
      %607 = sbr.rel (%p604) target = $region88
    $region87: #{tpu_custom_call.1} parent=5 // pred_region
      %s608 = ssub.s32 %s23, 1
      %p609 = scmp.lt.s32.totalorder %s32, 1
      %s610 = scalar_select %p609, %s32, 1
      %s611 = smul.addr %s610, 2
      %s612 = smul.addr %s611, 8
      %s613 = scalar_lea.vmem %s0, %s612
      %p614 = pneg %p61
      %p615 = pneg %p58
      %p616 = pneg %p82
      %p617 = pneg %p79
      %p618 = pneg %p103
      %p619 = pneg %p100
      %p620 = pneg %p124
      %p621 = pneg %p121
      %p622 = pneg %p145
      %p623 = pneg %p142
      %p624 = scmp.lt.s32.totalorder %s33, 1
      %s625 = scalar_select %p624, %s33, 1
      %s626 = scalar_lea.vmem %s5, %s625
      %p627 = pneg %p171
      %p628 = pneg %p168
      %p629 = scmp.lt.s32.totalorder %s33, 1
      %s630 = scalar_select %p629, %s33, 1
      %s631 = scalar_lea.vmem %s6, %s630
      %p632 = pneg %p197
      %p633 = pneg %p194
      %p634 = scmp.lt.s32.totalorder %s33, 1
      %s635 = scalar_select %p634, %s33, 1
      %s636 = smul.addr %s635, 4
      %s637 = smul.addr %s636, 8
      %s638 = scalar_lea.vmem %s7, %s637
      %p639 = pneg %p223
      %p640 = pneg %p220
      %p641 = scmp.lt.s32.totalorder %s33, 1
      %s642 = scalar_select %p641, %s33, 1
      %s643 = scalar_lea.vmem %s8, %s642
      %p644 = pneg %p249
      %p645 = pneg %p246
      %p646 = scmp.lt.s32.totalorder %s33, 1
      %s647 = scalar_select %p646, %s33, 1
      %s648 = smul.addr %s647, 4
      %s649 = smul.addr %s648, 8
      %s650 = scalar_lea.vmem %s9, %s649
      %p651 = pneg %p275
      %p652 = pneg %p272
      %p653 = scmp.lt.s32.totalorder %s33, 1
      %s654 = scalar_select %p653, %s33, 1
      %s655 = scalar_lea.vmem %s10, %s654
      %p656 = pneg %p301
      %p657 = pneg %p298
      %p658 = scmp.lt.s32.totalorder %s33, 1
      %s659 = scalar_select %p658, %s33, 1
      %s660 = scalar_lea.vmem %s11, %s659
      %p661 = pneg %p327
      %p662 = pneg %p324
      %p663 = scmp.lt.s32.totalorder %s33, 1
      %s664 = scalar_select %p663, %s33, 1
      %s665 = scalar_lea.vmem %s12, %s664
      %p666 = pneg %p353
      %p667 = pneg %p350
      %p668 = scmp.lt.s32.totalorder %s33, 1
      %s669 = scalar_select %p668, %s33, 1
      %s670 = smul.addr %s669, 4
      %s671 = smul.addr %s670, 8
      %s672 = scalar_lea.vmem %s13, %s671
      %p673 = pneg %p379
      %p674 = pneg %p376
      %p675 = scmp.lt.s32.totalorder %s33, 1
      %s676 = scalar_select %p675, %s33, 1
      %s677 = scalar_lea.vmem %s14, %s676
      %p678 = pneg %p405
      %p679 = pneg %p402
      %p680 = scmp.lt.s32.totalorder %s33, 1
      %s681 = scalar_select %p680, %s33, 1
      %s682 = smul.addr %s681, 8
      %s683 = smul.addr %s682, 8
      %s684 = scalar_lea.vmem %s15, %s683
      %p685 = pneg %p431
      %p686 = pneg %p428
      %p687 = scmp.lt.s32.totalorder %s33, 1
      %s688 = scalar_select %p687, %s33, 1
      %s689 = scalar_lea.vmem %s16, %s688
      %p690 = pneg %p457
      %p691 = pneg %p454
      %p692 = pneg %p483
      %p693 = pneg %p480
      %p694 = scmp.lt.s32.totalorder %s32, 1
      %s695 = scalar_select %p694, %s32, 1
      %s696 = smul.addr %s695, 8
      %s697 = scalar_lea.vmem %s17, %s696
      %p698 = scmp.lt.s32.totalorder %s32, 1
      %s699 = scalar_select %p698, %s32, 1
      %s700 = smul.addr %s699, 2
      %s701 = smul.addr %s700, 8
      %s702 = scalar_lea.vmem %s0, %s701
      %p703 = scmp.lt.s32.totalorder %s33, 1
      %s704 = scalar_select %p703, %s33, 1
      %s705 = scalar_lea.vmem %s5, %s704
      %p706 = scmp.lt.s32.totalorder %s33, 1
      %s707 = scalar_select %p706, %s33, 1
      %s708 = scalar_lea.vmem %s6, %s707
      %p709 = scmp.lt.s32.totalorder %s33, 1
      %s710 = scalar_select %p709, %s33, 1
      %s711 = smul.addr %s710, 4
      %s712 = smul.addr %s711, 8
      %s713 = scalar_lea.vmem %s7, %s712
      %p714 = scmp.lt.s32.totalorder %s33, 1
      %s715 = scalar_select %p714, %s33, 1
      %s716 = scalar_lea.vmem %s8, %s715
      %p717 = scmp.lt.s32.totalorder %s33, 1
      %s718 = scalar_select %p717, %s33, 1
      %s719 = smul.addr %s718, 4
      %s720 = smul.addr %s719, 8
      %s721 = scalar_lea.vmem %s9, %s720
      %p722 = scmp.lt.s32.totalorder %s33, 1
      %s723 = scalar_select %p722, %s33, 1
      %s724 = scalar_lea.vmem %s10, %s723
      %p725 = scmp.lt.s32.totalorder %s33, 1
      %s726 = scalar_select %p725, %s33, 1
      %s727 = scalar_lea.vmem %s11, %s726
      %p728 = scmp.lt.s32.totalorder %s33, 1
      %s729 = scalar_select %p728, %s33, 1
      %s730 = scalar_lea.vmem %s12, %s729
      %p731 = scmp.lt.s32.totalorder %s33, 1
      %s732 = scalar_select %p731, %s33, 1
      %s733 = smul.addr %s732, 4
      %s734 = smul.addr %s733, 8
      %s735 = scalar_lea.vmem %s13, %s734
      %p736 = scmp.lt.s32.totalorder %s33, 1
      %s737 = scalar_select %p736, %s33, 1
      %s738 = scalar_lea.vmem %s14, %s737
      %p739 = scmp.lt.s32.totalorder %s33, 1
      %s740 = scalar_select %p739, %s33, 1
      %s741 = smul.addr %s740, 8
      %s742 = smul.addr %s741, 8
      %s743 = scalar_lea.vmem %s15, %s742
      %p744 = scmp.lt.s32.totalorder %s33, 1
      %s745 = scalar_select %p744, %s33, 1
      %s746 = scalar_lea.vmem %s16, %s745
      %p747 = scmp.lt.s32.totalorder %s32, 1
      %s748 = scalar_select %p747, %s32, 1
      %s749 = smul.addr %s748, 8
      %s750 = scalar_lea.vmem %s17, %s749
      %p751 = scmp.eq.s32.totalorder %s33, 0
      // Predicated region
      $region89: #{tpu_custom_call.1} parent=87 // pred_check
        %p752 = pneg %p751
      $region90: #{tpu_custom_call.1} parent=87 // pred_check_branch
        %754 = sbr.rel (%p752) target = $region92
      $region91: #{tpu_custom_call.1} parent=87 // pred_region
        %v755 = vld [vmem:[%s702] sm:$0x1f]
        %v756 = vld [vmem:[%s702 + $0x8] sm:$0x1f]
        %v757 = vld [vmem:[%s2] sm:$0xff]
        %v758 = vld [vmem:[%s2 + $0x8] sm:$0xff]
        %v759 = vld [vmem:[%s2 + $0x10] sm:$0xff]
        %v760 = vld [vmem:[%s2 + $0x18] sm:$0xff]
        %v761 = vld [vmem:[%s2 + $0x20] sm:$0xff]
        %v762 = vld [vmem:[%s2 + $0x28] sm:$0xff]
        %v763 = vld [vmem:[%s2 + $0x30] sm:$0xff]
        %v764 = vld [vmem:[%s2 + $0x38] sm:$0xff]
        %v765 = vld [vmem:[%s2 + $0x40] sm:$0xff]
        %v766 = vld [vmem:[%s2 + $0x48] sm:$0xff]
        %v767 = vld [vmem:[%s2 + $0x50] sm:$0xff]
        %v768 = vld [vmem:[%s2 + $0x58] sm:$0xff]
        %v769 = vld [vmem:[%s2 + $0x60] sm:$0xff]
        %v770 = vld [vmem:[%s2 + $0x68] sm:$0xff]
        %v771 = vld [vmem:[%s2 + $0x70] sm:$0xff]
        %v772 = vld [vmem:[%s2 + $0x78] sm:$0xff]
        %v773 = vld [vmem:[%s2 + $0x80] sm:$0xff]
        %v774 = vld [vmem:[%s2 + $0x88] sm:$0xff]
        %v775 = vld [vmem:[%s2 + $0x90] sm:$0xff]
        %v776 = vld [vmem:[%s2 + $0x98] sm:$0xff]
        %v777 = vld [vmem:[%s2 + $0xa0] sm:$0xff]
        %v778 = vld [vmem:[%s2 + $0xa8] sm:$0xff]
        %v779 = vld [vmem:[%s2 + $0xb0] sm:$0xff]
        %v780 = vld [vmem:[%s2 + $0xb8] sm:$0xff]
        %v781 = vld [vmem:[%s1] sm:$0x1f]
        %vm782 = vcmask 523264
        %v784 = vsel %vm782, %v756, 0
        %786 = vmatprep.subr.mxu0 0.0
        %787 = vmatpush1.msra.mxu0 %v757
        %788 = vmatprep.subr.mxu0 0.0
        %789 = vmatpush1.msra.mxu0 %v758
        %790 = vmatprep.subr.mxu0 0.0
        %791 = vmatpush1.msra.mxu0 %v759
        %792 = vmatprep.subr.mxu0 0.0
        %793 = vmatpush1.msra.mxu0 %v760
        %794 = vmatprep.subr.mxu0 0.0
        %795 = vmatpush1.msra.mxu0 %v761
        %796 = vmatprep.subr.mxu0 0.0
        %797 = vmatpush1.msra.mxu0 %v762
        %798 = vmatprep.subr.mxu0 0.0
        %799 = vmatpush1.msra.mxu0 %v763
        %800 = vmatprep.subr.mxu0 0.0
        %801 = vmatpush1.msra.mxu0 %v764
        %802 = vmatprep.subr.mxu0 0.0
        %803 = vmatpush1.msra.mxu0 %v765
        %804 = vmatprep.subr.mxu0 0.0
        %805 = vmatpush1.msra.mxu0 %v766
        %806 = vmatprep.subr.mxu0 0.0
        %807 = vmatpush1.msra.mxu0 %v767
        %808 = vmatprep.subr.mxu0 0.0
        %809 = vmatpush1.msra.mxu0 %v768
        %810 = vmatprep.subr.mxu0 0.0
        %811 = vmatpush1.msra.mxu0 %v769
        %812 = vmatprep.subr.mxu0 0.0
        %813 = vmatpush1.msra.mxu0 %v770
        %814 = vmatprep.subr.mxu0 0.0
        %815 = vmatpush1.msra.mxu0 %v771
        %816 = vmatprep.subr.mxu0 0.0
        %817 = vmatpush1.msra.mxu0 %v772
        %818 = vmatprep.subr.mxu0 0.0
        %819 = vmatpush1.msra.mxu0 %v773
        %820 = vmatprep.subr.mxu0 0.0
        %821 = vmatpush1.msra.mxu0 %v774
        %822 = vmatprep.subr.mxu0 0.0
        %823 = vmatpush1.msra.mxu0 %v775
        %824 = vmatprep.subr.mxu0 0.0
        %825 = vmatpush1.msra.mxu0 %v776
        %826 = vmatprep.subr.mxu0 0.0
        %827 = vmatpush1.msra.mxu0 %v777
        %828 = vmatprep.subr.mxu0 0.0
        %829 = vmatpush1.msra.mxu0 %v778
        %830 = vmatprep.subr.mxu0 0.0
        %831 = vmatpush1.msra.mxu0 %v779
        %832 = vmatprep.subr.mxu0 0.0
        %833 = vmatpush1.msra.mxu0 %v780
        %834 = vmatprep.subr.mxu0 0.0
        %835 = vmatpush1.msra.mxu0 0.0
        %836 = vmatprep.subr.mxu0 0.0
        %837 = vmatpush1.msra.mxu0 0.0
        %838 = vmatprep.subr.mxu0 0.0
        %839 = vmatpush1.msra.mxu0 0.0
        %840 = vmatprep.subr.mxu0 0.0
        %841 = vmatpush1.msra.mxu0 0.0
        %842 = vmatprep.subr.mxu0 0.0
        %843 = vmatpush1.msra.mxu0 0.0
        %844 = vmatprep.subr.mxu0 0.0
        %845 = vmatpush1.msra.mxu0 0.0
        %846 = vmatprep.subr.mxu0 0.0
        %847 = vmatpush1.msra.mxu0 0.0
        %848 = vmatprep.subr.mxu0 0.0
        %849 = vmatpush1.msra.mxu0 0.0
        %850 = vmatprep.mubr.f32.mxu0 %v784
        %851 = vmatmul.mubr.f32.gmra.mrb[0].mxu0 %v755
        %v852 = vpop.f32.mrb[0].mxu0
        %v853 = vadd.f32 %v781, %v852
        %v854 = vpop.f32.mrb[0].mxu0
        %855 = vdwg.mxu0
        %v856 = vld [vmem:[%s3] sm:$0x1]
        %v857 = vld [vmem:[%s4] sm:$0x1]
        %vm858 = vcmask 258048
        %v859 = vsel %vm858, %v853, 0.0
        %860 = vadd.xlane.f32.xlu0 %v859
        %v861 = vpop.xlane.xlu0 %860
        %v862 = vrcp.pop 32.0
        %v863 = vmul.f32 %v861, %v862
        %v864 = vsub.f32 %v853, %v863
        %v865 = vmul.f32 %v864, %v864
        %v866 = vsel %vm858, %v865, 0.0
        %867 = vadd.xlane.f32.xlu0 %v866
        %v868 = vpop.xlane.xlu0 %867
        %v869 = vmul.f32 %v868, %v862
        %v870 = vadd.f32 %v869, 1e-05
        %v871 = vrsqrt.pop %v870
        %v872 = vmul.f32 %v864, %v871
        %v874 = vlaneseq
        %v875 = vshrl.u32 %v874, 7
        %v876 = vsub.s32 0, %v875
        %v877 = vrot.slane %v856, %v876
        %v879 = vmul.f32 %v872, %v877
        %v881 = vlaneseq
        %v882 = vshrl.u32 %v881, 7
        %v883 = vsub.s32 0, %v882
        %v884 = vrot.slane %v857, %v883
        %v886 = vadd.f32 %v879, %v884
        %887 = vst.msk [vmem:[%s750] sm:$0x1f] %vm858, %v886
      $region92: #{tpu_custom_call.1} parent=87 // pred_fallthru
        _
      %v888 = vld [vmem:[%s750] sm:$0x1f]
      %v889 = vld [vmem:[%s705] sm:$0x1]
      %v890 = vld [vmem:[%s708] sm:$0x1]
      %vm891 = vcmask 258048
      %v892 = vsel %vm891, %v888, 0.0
      %893 = vadd.xlane.f32.xlu0 %v892
      %v894 = vpop.xlane.xlu0 %893
      %v895 = vrcp.pop 32.0
      %v896 = vmul.f32 %v894, %v895
      %v897 = vsub.f32 %v888, %v896
      %v898 = vmul.f32 %v897, %v897
      %v899 = vsel %vm891, %v898, 0.0
      %900 = vadd.xlane.f32.xlu0 %v899
      %v901 = vpop.xlane.xlu0 %900
      %v902 = vmul.f32 %v901, %v895
      %v903 = vadd.f32 %v902, 1e-05
      %v904 = vrsqrt.pop %v903
      %v905 = vmul.f32 %v897, %v904
      %v907 = vlaneseq
      %v908 = vshrl.u32 %v907, 7
      %v909 = vsub.s32 0, %v908
      %v910 = vrot.slane %v889, %v909
      %v912 = vmul.f32 %v905, %v910
      %v914 = vlaneseq
      %v915 = vshrl.u32 %v914, 7
      %v916 = vsub.s32 0, %v915
      %v917 = vrot.slane %v890, %v916
      %v919 = vadd.f32 %v912, %v917
      %v920 = vld [vmem:[%s713] sm:$0xff]
      %v921 = vld [vmem:[%s713 + $0x8] sm:$0xff]
      %v922 = vld [vmem:[%s713 + $0x10] sm:$0xff]
      %v923 = vld [vmem:[%s713 + $0x18] sm:$0xff]
      %v924 = vld [vmem:[%s716] sm:$0x1]
      %v926 = vlaneseq
      %v927 = vshrl.u32 %v926, 7
      %v928 = vsub.s32 0, %v927
      %v929 = vrot.slane %v924, %v928
      %vm931 = vcmask 261120
      %v933 = vsel %vm931, %v919, 0
      %935 = vmatprep.subr.mxu0 0.0
      %936 = vmatpush1.msra.mxu0 %v920
      %937 = vmatprep.subr.mxu0 0.0
      %938 = vmatpush1.msra.mxu0 %v921
      %939 = vmatprep.subr.mxu0 0.0
      %940 = vmatpush1.msra.mxu0 %v922
      %941 = vmatprep.subr.mxu0 0.0
      %942 = vmatpush1.msra.mxu0 %v923
      %943 = vmatprep.subr.mxu0 0.0
      %944 = vmatpush1.msra.mxu0 0.0
      %945 = vmatprep.subr.mxu0 0.0
      %946 = vmatpush1.msra.mxu0 0.0
      %947 = vmatprep.subr.mxu0 0.0
      %948 = vmatpush1.msra.mxu0 0.0
      %949 = vmatprep.subr.mxu0 0.0
      %950 = vmatpush1.msra.mxu0 0.0
      %951 = vmatprep.subr.mxu0 0.0
      %952 = vmatpush1.msra.mxu0 0.0
      %953 = vmatprep.subr.mxu0 0.0
      %954 = vmatpush1.msra.mxu0 0.0
      %955 = vmatprep.subr.mxu0 0.0
      %956 = vmatpush1.msra.mxu0 0.0
      %957 = vmatprep.subr.mxu0 0.0
      %958 = vmatpush1.msra.mxu0 0.0
      %959 = vmatprep.subr.mxu0 0.0
      %960 = vmatpush1.msra.mxu0 0.0
      %961 = vmatprep.subr.mxu0 0.0
      %962 = vmatpush1.msra.mxu0 0.0
      %963 = vmatprep.subr.mxu0 0.0
      %964 = vmatpush1.msra.mxu0 0.0
      %965 = vmatprep.subr.mxu0 0.0
      %966 = vmatpush1.msra.mxu0 0.0
      %967 = vmatprep.subr.mxu0 0.0
      %968 = vmatpush1.msra.mxu0 0.0
      %969 = vmatprep.subr.mxu0 0.0
      %970 = vmatpush1.msra.mxu0 0.0
      %971 = vmatprep.subr.mxu0 0.0
      %972 = vmatpush1.msra.mxu0 0.0
      %973 = vmatprep.subr.mxu0 0.0
      %974 = vmatpush1.msra.mxu0 0.0
      %975 = vmatprep.subr.mxu0 0.0
      %976 = vmatpush1.msra.mxu0 0.0
      %977 = vmatprep.subr.mxu0 0.0
      %978 = vmatpush1.msra.mxu0 0.0
      %979 = vmatprep.subr.mxu0 0.0
      %980 = vmatpush1.msra.mxu0 0.0
      %981 = vmatprep.subr.mxu0 0.0
      %982 = vmatpush1.msra.mxu0 0.0
      %983 = vmatprep.subr.mxu0 0.0
      %984 = vmatpush1.msra.mxu0 0.0
      %985 = vmatprep.subr.mxu0 0.0
      %986 = vmatpush1.msra.mxu0 0.0
      %987 = vmatprep.subr.mxu0 0.0
      %988 = vmatpush1.msra.mxu0 0.0
      %989 = vmatprep.subr.mxu0 0.0
      %990 = vmatpush1.msra.mxu0 0.0
      %991 = vmatprep.subr.mxu0 0.0
      %992 = vmatpush1.msra.mxu0 0.0
      %993 = vmatprep.subr.mxu0 0.0
      %994 = vmatpush1.msra.mxu0 0.0
      %995 = vmatprep.subr.mxu0 0.0
      %996 = vmatpush1.msra.mxu0 0.0
      %997 = vmatprep.subr.mxu0 0.0
      %998 = vmatpush1.msra.mxu0 0.0
      %999 = vmatprep.mubr.f32.mxu0 0.0
      %1000 = vmatmul.mubr.f32.gmra.mrb[0].mxu0 %v933
      %v1001 = vpop.f32.mrb[0].mxu0
      %v1002 = vadd.f32 %v929, %v1001
      %v1003 = vpop.f32.mrb[0].mxu0
      %1004 = vdwg.mxu0
      %v1005 = vmul.f32 %v1002, 0.35355338
      %v1006 = vld [vmem:[%s721] sm:$0xff]
      %v1007 = vld [vmem:[%s721 + $0x8] sm:$0xff]
      %v1008 = vld [vmem:[%s721 + $0x10] sm:$0xff]
      %v1009 = vld [vmem:[%s721 + $0x18] sm:$0xff]
      %1011 = vrot.lane.b32.xlu0 %v1002, 96
      %v1012 = vpop.permute.xlu0 %1011
      %vm1013 = vcmask 64512
      %v1015 = vsel %vm1013, %v1005, 0
      %v1017 = vsel %vm1013, %v1012, 0
      %1019 = vmatprep.subr.mxu0 0.0
      %1020 = vmatpush1.xpose.msra.mxu0 %v1017
      %1021 = vmatprep.subr.mxu0 0.0
      %1022 = vmatpush1.xpose.msra.mxu0 0.0
      %1023 = vmatprep.subr.mxu0 0.0
      %1024 = vmatpush1.xpose.msra.mxu0 0.0
      %1025 = vmatprep.subr.mxu0 0.0
      %1026 = vmatpush1.xpose.msra.mxu0 0.0
      %1027 = vmatprep.subr.mxu0 0.0
      %1028 = vmatpush1.xpose.msra.mxu0 0.0
      %1029 = vmatprep.subr.mxu0 0.0
      %1030 = vmatpush1.xpose.msra.mxu0 0.0
      %1031 = vmatprep.subr.mxu0 0.0
      %1032 = vmatpush1.xpose.msra.mxu0 0.0
      %1033 = vmatprep.subr.mxu0 0.0
      %1034 = vmatpush1.xpose.msra.mxu0 0.0
      %1035 = vmatprep.subr.mxu0 0.0
      %1036 = vmatpush1.xpose.msra.mxu0 0.0
      %1037 = vmatprep.subr.mxu0 0.0
      %1038 = vmatpush1.xpose.msra.mxu0 0.0
      %1039 = vmatprep.subr.mxu0 0.0
      %1040 = vmatpush1.xpose.msra.mxu0 0.0
      %1041 = vmatprep.subr.mxu0 0.0
      %1042 = vmatpush1.xpose.msra.mxu0 0.0
      %1043 = vmatprep.subr.mxu0 0.0
      %1044 = vmatpush1.xpose.msra.mxu0 0.0
      %1045 = vmatprep.subr.mxu0 0.0
      %1046 = vmatpush1.xpose.msra.mxu0 0.0
      %1047 = vmatprep.subr.mxu0 0.0
      %1048 = vmatpush1.xpose.msra.mxu0 0.0
      %1049 = vmatprep.subr.mxu0 0.0
      %1050 = vmatpush1.xpose.msra.mxu0 0.0
      %1051 = vmatprep.subr.mxu0 0.0
      %1052 = vmatpush1.xpose.msra.mxu0 0.0
      %1053 = vmatprep.subr.mxu0 0.0
      %1054 = vmatpush1.xpose.msra.mxu0 0.0
      %1055 = vmatprep.subr.mxu0 0.0
      %1056 = vmatpush1.xpose.msra.mxu0 0.0
      %1057 = vmatprep.subr.mxu0 0.0
      %1058 = vmatpush1.xpose.msra.mxu0 0.0
      %1059 = vmatprep.subr.mxu0 0.0
      %1060 = vmatpush1.xpose.msra.mxu0 0.0
      %1061 = vmatprep.subr.mxu0 0.0
      %1062 = vmatpush1.xpose.msra.mxu0 0.0
      %1063 = vmatprep.subr.mxu0 0.0
      %1064 = vmatpush1.xpose.msra.mxu0 0.0
      %1065 = vmatprep.subr.mxu0 0.0
      %1066 = vmatpush1.xpose.msra.mxu0 0.0
      %1067 = vmatprep.subr.mxu0 0.0
      %1068 = vmatpush1.xpose.msra.mxu0 0.0
      %1069 = vmatprep.subr.mxu0 0.0
      %1070 = vmatpush1.xpose.msra.mxu0 0.0
      %1071 = vmatprep.subr.mxu0 0.0
      %1072 = vmatpush1.xpose.msra.mxu0 0.0
      %1073 = vmatprep.subr.mxu0 0.0
      %1074 = vmatpush1.xpose.msra.mxu0 0.0
      %1075 = vmatprep.subr.mxu0 0.0
      %1076 = vmatpush1.xpose.msra.mxu0 0.0
      %1077 = vmatprep.subr.mxu0 0.0
      %1078 = vmatpush1.xpose.msra.mxu0 0.0
      %1079 = vmatprep.subr.mxu0 0.0
      %1080 = vmatpush1.xpose.msra.mxu0 0.0
      %1081 = vmatprep.subr.mxu0 0.0
      %1082 = vmatpush1.xpose.msra.mxu0 0.0
      %1083 = vmatprep.mubr.f32.mxu0 0.0
      %1084 = vmatmul.mubr.f32.gmra.mrb[0].mxu0 %v1015
      %v1085 = vpop.f32.mrb[0].mxu0
      %v1086 = vadd.f32 0.0, %v1085
      %v1087 = vpop.f32.mrb[0].mxu0
      %1088 = vdwg.mxu0
      %vm1089 = vcmask 36864
      %v1090 = vsel %vm1089, %v1086, -inf
      %1091 = vmax.xlane.f32.xlu0 %v1090
      %v1092 = vpop.xlane.xlu0 %1091
      %v1093 = vsub.f32 %v1086, %v1092
      %v1094 = vmul.f32 %v1093, 1.442695
      %v1095 = vpow.pop %v1094
      %v1096 = vsel %vm1089, %v1095, 0.0
      %1097 = vadd.xlane.f32.xlu0 %v1096
      %v1098 = vpop.xlane.xlu0 %1097
      %v1099 = vrcp.pop %v1098
      %v1100 = vmul.f32 %v1095, %v1099
      %1101 = vrot.lane.b32.xlu0 %v1002, 64
      %v1102 = vpop.permute.xlu0 %1101
      %vm1103 = vcmask 39936
      %v1105 = vsel %vm1103, %v1100, 0
      %vm1107 = vcmask 1044480
      %v1108 = vsel %vm1107, %v1102, 0
      %1110 = vmatprep.subr.mxu0 0.0
      %1111 = vmatpush1.msra.mxu0 %v1108
      %1112 = vmatprep.subr.mxu0 0.0
      %1113 = vmatpush1.msra.mxu0 0.0
      %1114 = vmatprep.subr.mxu0 0.0
      %1115 = vmatpush1.msra.mxu0 0.0
      %1116 = vmatprep.subr.mxu0 0.0
      %1117 = vmatpush1.msra.mxu0 0.0
      %1118 = vmatprep.subr.mxu0 0.0
      %1119 = vmatpush1.msra.mxu0 0.0
      %1120 = vmatprep.subr.mxu0 0.0
      %1121 = vmatpush1.msra.mxu0 0.0
      %1122 = vmatprep.subr.mxu0 0.0
      %1123 = vmatpush1.msra.mxu0 0.0
      %1124 = vmatprep.subr.mxu0 0.0
      %1125 = vmatpush1.msra.mxu0 0.0
      %1126 = vmatprep.subr.mxu0 0.0
      %1127 = vmatpush1.msra.mxu0 0.0
      %1128 = vmatprep.subr.mxu0 0.0
      %1129 = vmatpush1.msra.mxu0 0.0
      %1130 = vmatprep.subr.mxu0 0.0
      %1131 = vmatpush1.msra.mxu0 0.0
      %1132 = vmatprep.subr.mxu0 0.0
      %1133 = vmatpush1.msra.mxu0 0.0
      %1134 = vmatprep.subr.mxu0 0.0
      %1135 = vmatpush1.msra.mxu0 0.0
      %1136 = vmatprep.subr.mxu0 0.0
      %1137 = vmatpush1.msra.mxu0 0.0
      %1138 = vmatprep.subr.mxu0 0.0
      %1139 = vmatpush1.msra.mxu0 0.0
      %1140 = vmatprep.subr.mxu0 0.0
      %1141 = vmatpush1.msra.mxu0 0.0
      %1142 = vmatprep.subr.mxu0 0.0
      %1143 = vmatpush1.msra.mxu0 0.0
      %1144 = vmatprep.subr.mxu0 0.0
      %1145 = vmatpush1.msra.mxu0 0.0
      %1146 = vmatprep.subr.mxu0 0.0
      %1147 = vmatpush1.msra.mxu0 0.0
      %1148 = vmatprep.subr.mxu0 0.0
      %1149 = vmatpush1.msra.mxu0 0.0
      %1150 = vmatprep.subr.mxu0 0.0
      %1151 = vmatpush1.msra.mxu0 0.0
      %1152 = vmatprep.subr.mxu0 0.0
      %1153 = vmatpush1.msra.mxu0 0.0
      %1154 = vmatprep.subr.mxu0 0.0
      %1155 = vmatpush1.msra.mxu0 0.0
      %1156 = vmatprep.subr.mxu0 0.0
      %1157 = vmatpush1.msra.mxu0 0.0
      %1158 = vmatprep.subr.mxu0 0.0
      %1159 = vmatpush1.msra.mxu0 0.0
      %1160 = vmatprep.subr.mxu0 0.0
      %1161 = vmatpush1.msra.mxu0 0.0
      %1162 = vmatprep.subr.mxu0 0.0
      %1163 = vmatpush1.msra.mxu0 0.0
      %1164 = vmatprep.subr.mxu0 0.0
      %1165 = vmatpush1.msra.mxu0 0.0
      %1166 = vmatprep.subr.mxu0 0.0
      %1167 = vmatpush1.msra.mxu0 0.0
      %1168 = vmatprep.subr.mxu0 0.0
      %1169 = vmatpush1.msra.mxu0 0.0
      %1170 = vmatprep.subr.mxu0 0.0
      %1171 = vmatpush1.msra.mxu0 0.0
      %1172 = vmatprep.subr.mxu0 0.0
      %1173 = vmatpush1.msra.mxu0 0.0
      %1174 = vmatprep.mubr.f32.mxu0 0.0
      %1175 = vmatmul.mubr.f32.gmra.mrb[0].mxu0 %v1105
      %v1176 = vpop.f32.mrb[0].mxu0
      %v1177 = vadd.f32 0.0, %v1176
      %v1178 = vpop.f32.mrb[0].mxu0
      %1179 = vdwg.mxu0
      %1180 = vrot.lane.b32.xlu0 %v1005, 120
      %v1181 = vpop.permute.xlu0 %1180
      %1182 = vrot.lane.b32.xlu0 %v1002, 88
      %v1183 = vpop.permute.xlu0 %1182
      %v1184 = vsel %vm1013, %v1181, 0
      %v1186 = vsel %vm1013, %v1183, 0
      %1188 = vmatprep.subr.mxu0 0.0
      %1189 = vmatpush1.xpose.msra.mxu0 %v1186
      %1190 = vmatprep.subr.mxu0 0.0
      %1191 = vmatpush1.xpose.msra.mxu0 0.0
      %1192 = vmatprep.subr.mxu0 0.0
      %1193 = vmatpush1.xpose.msra.mxu0 0.0
      %1194 = vmatprep.subr.mxu0 0.0
      %1195 = vmatpush1.xpose.msra.mxu0 0.0
      %1196 = vmatprep.subr.mxu0 0.0
      %1197 = vmatpush1.xpose.msra.mxu0 0.0
      %1198 = vmatprep.subr.mxu0 0.0
      %1199 = vmatpush1.xpose.msra.mxu0 0.0
      %1200 = vmatprep.subr.mxu0 0.0
      %1201 = vmatpush1.xpose.msra.mxu0 0.0
      %1202 = vmatprep.subr.mxu0 0.0
      %1203 = vmatpush1.xpose.msra.mxu0 0.0
      %1204 = vmatprep.subr.mxu0 0.0
      %1205 = vmatpush1.xpose.msra.mxu0 0.0
      %1206 = vmatprep.subr.mxu0 0.0
      %1207 = vmatpush1.xpose.msra.mxu0 0.0
      %1208 = vmatprep.subr.mxu0 0.0
      %1209 = vmatpush1.xpose.msra.mxu0 0.0
      %1210 = vmatprep.subr.mxu0 0.0
      %1211 = vmatpush1.xpose.msra.mxu0 0.0
      %1212 = vmatprep.subr.mxu0 0.0
      %1213 = vmatpush1.xpose.msra.mxu0 0.0
      %1214 = vmatprep.subr.mxu0 0.0
      %1215 = vmatpush1.xpose.msra.mxu0 0.0
      %1216 = vmatprep.subr.mxu0 0.0
      %1217 = vmatpush1.xpose.msra.mxu0 0.0
      %1218 = vmatprep.subr.mxu0 0.0
      %1219 = vmatpush1.xpose.msra.mxu0 0.0
      %1220 = vmatprep.subr.mxu0 0.0
      %1221 = vmatpush1.xpose.msra.mxu0 0.0
      %1222 = vmatprep.subr.mxu0 0.0
      %1223 = vmatpush1.xpose.msra.mxu0 0.0
      %1224 = vmatprep.subr.mxu0 0.0
      %1225 = vmatpush1.xpose.msra.mxu0 0.0
      %1226 = vmatprep.subr.mxu0 0.0
      %1227 = vmatpush1.xpose.msra.mxu0 0.0
      %1228 = vmatprep.subr.mxu0 0.0
      %1229 = vmatpush1.xpose.msra.mxu0 0.0
      %1230 = vmatprep.subr.mxu0 0.0
      %1231 = vmatpush1.xpose.msra.mxu0 0.0
      %1232 = vmatprep.subr.mxu0 0.0
      %1233 = vmatpush1.xpose.msra.mxu0 0.0
      %1234 = vmatprep.subr.mxu0 0.0
      %1235 = vmatpush1.xpose.msra.mxu0 0.0
      %1236 = vmatprep.subr.mxu0 0.0
      %1237 = vmatpush1.xpose.msra.mxu0 0.0
      %1238 = vmatprep.subr.mxu0 0.0
      %1239 = vmatpush1.xpose.msra.mxu0 0.0
      %1240 = vmatprep.subr.mxu0 0.0
      %1241 = vmatpush1.xpose.msra.mxu0 0.0
      %1242 = vmatprep.subr.mxu0 0.0
      %1243 = vmatpush1.xpose.msra.mxu0 0.0
      %1244 = vmatprep.subr.mxu0 0.0
      %1245 = vmatpush1.xpose.msra.mxu0 0.0
      %1246 = vmatprep.subr.mxu0 0.0
      %1247 = vmatpush1.xpose.msra.mxu0 0.0
      %1248 = vmatprep.subr.mxu0 0.0
      %1249 = vmatpush1.xpose.msra.mxu0 0.0
      %1250 = vmatprep.subr.mxu0 0.0
      %1251 = vmatpush1.xpose.msra.mxu0 0.0
      %1252 = vmatprep.mubr.f32.mxu0 0.0
      %1253 = vmatmul.mubr.f32.gmra.mrb[0].mxu0 %v1184
      %v1254 = vpop.f32.mrb[0].mxu0
      %v1255 = vadd.f32 0.0, %v1254
      %v1256 = vpop.f32.mrb[0].mxu0
      %1257 = vdwg.mxu0
      %v1258 = vsel %vm1089, %v1255, -inf
      %1259 = vmax.xlane.f32.xlu0 %v1258
      %v1260 = vpop.xlane.xlu0 %1259
      %v1261 = vsub.f32 %v1255, %v1260
      %v1262 = vmul.f32 %v1261, 1.442695
      %v1263 = vpow.pop %v1262
      %v1264 = vsel %vm1089, %v1263, 0.0
      %1265 = vadd.xlane.f32.xlu0 %v1264
      %v1266 = vpop.xlane.xlu0 %1265
      %v1267 = vrcp.pop %v1266
      %v1268 = vmul.f32 %v1263, %v1267
      %1269 = vrot.lane.b32.xlu0 %v1002, 56
      %v1270 = vpop.permute.xlu0 %1269
      %v1272 = vsel %vm1103, %v1268, 0
      %v1274 = vsel %vm1107, %v1270, 0
      %1276 = vmatprep.subr.mxu0 0.0
      %1277 = vmatpush1.msra.mxu0 %v1274
      %1278 = vmatprep.subr.mxu0 0.0
      %1279 = vmatpush1.msra.mxu0 0.0
      %1280 = vmatprep.subr.mxu0 0.0
      %1281 = vmatpush1.msra.mxu0 0.0
      %1282 = vmatprep.subr.mxu0 0.0
      %1283 = vmatpush1.msra.mxu0 0.0
      %1284 = vmatprep.subr.mxu0 0.0
      %1285 = vmatpush1.msra.mxu0 0.0
      %1286 = vmatprep.subr.mxu0 0.0
      %1287 = vmatpush1.msra.mxu0 0.0
      %1288 = vmatprep.subr.mxu0 0.0
      %1289 = vmatpush1.msra.mxu0 0.0
      %1290 = vmatprep.subr.mxu0 0.0
      %1291 = vmatpush1.msra.mxu0 0.0
      %1292 = vmatprep.subr.mxu0 0.0
      %1293 = vmatpush1.msra.mxu0 0.0
      %1294 = vmatprep.subr.mxu0 0.0
      %1295 = vmatpush1.msra.mxu0 0.0
      %1296 = vmatprep.subr.mxu0 0.0
      %1297 = vmatpush1.msra.mxu0 0.0
      %1298 = vmatprep.subr.mxu0 0.0
      %1299 = vmatpush1.msra.mxu0 0.0
      %1300 = vmatprep.subr.mxu0 0.0
      %1301 = vmatpush1.msra.mxu0 0.0
      %1302 = vmatprep.subr.mxu0 0.0
      %1303 = vmatpush1.msra.mxu0 0.0
      %1304 = vmatprep.subr.mxu0 0.0
      %1305 = vmatpush1.msra.mxu0 0.0
      %1306 = vmatprep.subr.mxu0 0.0
      %1307 = vmatpush1.msra.mxu0 0.0
      %1308 = vmatprep.subr.mxu0 0.0
      %1309 = vmatpush1.msra.mxu0 0.0
      %1310 = vmatprep.subr.mxu0 0.0
      %1311 = vmatpush1.msra.mxu0 0.0
      %1312 = vmatprep.subr.mxu0 0.0
      %1313 = vmatpush1.msra.mxu0 0.0
      %1314 = vmatprep.subr.mxu0 0.0
      %1315 = vmatpush1.msra.mxu0 0.0
      %1316 = vmatprep.subr.mxu0 0.0
      %1317 = vmatpush1.msra.mxu0 0.0
      %1318 = vmatprep.subr.mxu0 0.0
      %1319 = vmatpush1.msra.mxu0 0.0
      %1320 = vmatprep.subr.mxu0 0.0
      %1321 = vmatpush1.msra.mxu0 0.0
      %1322 = vmatprep.subr.mxu0 0.0
      %1323 = vmatpush1.msra.mxu0 0.0
      %1324 = vmatprep.subr.mxu0 0.0
      %1325 = vmatpush1.msra.mxu0 0.0
      %1326 = vmatprep.subr.mxu0 0.0
      %1327 = vmatpush1.msra.mxu0 0.0
      %1328 = vmatprep.subr.mxu0 0.0
      %1329 = vmatpush1.msra.mxu0 0.0
      %1330 = vmatprep.subr.mxu0 0.0
      %1331 = vmatpush1.msra.mxu0 0.0
      %1332 = vmatprep.subr.mxu0 0.0
      %1333 = vmatpush1.msra.mxu0 0.0
      %1334 = vmatprep.subr.mxu0 0.0
      %1335 = vmatpush1.msra.mxu0 0.0
      %1336 = vmatprep.subr.mxu0 0.0
      %1337 = vmatpush1.msra.mxu0 0.0
      %1338 = vmatprep.subr.mxu0 0.0
      %1339 = vmatpush1.msra.mxu0 0.0
      %1340 = vmatprep.mubr.f32.mxu0 0.0
      %1341 = vmatmul.mubr.f32.gmra.mrb[0].mxu0 %v1272
      %v1342 = vpop.f32.mrb[0].mxu0
      %v1343 = vadd.f32 0.0, %v1342
      %v1344 = vpop.f32.mrb[0].mxu0
      %1345 = vdwg.mxu0
      %v1347 = vsel %vm1013, %v1343, 0
      %1349 = vmatprep.subr.mxu0 0.0
      %1350 = vmatpush1.msra.mxu0 %v1007
      %1351 = vmatprep.subr.mxu0 0.0
      %1352 = vmatpush1.msra.mxu0 0.0
      %1353 = vmatprep.subr.mxu0 0.0
      %1354 = vmatpush1.msra.mxu0 0.0
      %1355 = vmatprep.subr.mxu0 0.0
      %1356 = vmatpush1.msra.mxu0 0.0
      %1357 = vmatprep.subr.mxu0 0.0
      %1358 = vmatpush1.msra.mxu0 0.0
      %1359 = vmatprep.subr.mxu0 0.0
      %1360 = vmatpush1.msra.mxu0 0.0
      %1361 = vmatprep.subr.mxu0 0.0
      %1362 = vmatpush1.msra.mxu0 0.0
      %1363 = vmatprep.subr.mxu0 0.0
      %1364 = vmatpush1.msra.mxu0 0.0
      %1365 = vmatprep.subr.mxu0 0.0
      %1366 = vmatpush1.msra.mxu0 0.0
      %1367 = vmatprep.subr.mxu0 0.0
      %1368 = vmatpush1.msra.mxu0 0.0
      %1369 = vmatprep.subr.mxu0 0.0
      %1370 = vmatpush1.msra.mxu0 0.0
      %1371 = vmatprep.subr.mxu0 0.0
      %1372 = vmatpush1.msra.mxu0 0.0
      %1373 = vmatprep.subr.mxu0 0.0
      %1374 = vmatpush1.msra.mxu0 0.0
      %1375 = vmatprep.subr.mxu0 0.0
      %1376 = vmatpush1.msra.mxu0 0.0
      %1377 = vmatprep.subr.mxu0 0.0
      %1378 = vmatpush1.msra.mxu0 0.0
      %1379 = vmatprep.subr.mxu0 0.0
      %1380 = vmatpush1.msra.mxu0 0.0
      %1381 = vmatprep.subr.mxu0 0.0
      %1382 = vmatpush1.msra.mxu0 0.0
      %1383 = vmatprep.subr.mxu0 0.0
      %1384 = vmatpush1.msra.mxu0 0.0
      %1385 = vmatprep.subr.mxu0 0.0
      %1386 = vmatpush1.msra.mxu0 0.0
      %1387 = vmatprep.subr.mxu0 0.0
      %1388 = vmatpush1.msra.mxu0 0.0
      %1389 = vmatprep.subr.mxu0 0.0
      %1390 = vmatpush1.msra.mxu0 0.0
      %1391 = vmatprep.subr.mxu0 0.0
      %1392 = vmatpush1.msra.mxu0 0.0
      %1393 = vmatprep.subr.mxu0 0.0
      %1394 = vmatpush1.msra.mxu0 0.0
      %1395 = vmatprep.subr.mxu0 0.0
      %1396 = vmatpush1.msra.mxu0 0.0
      %1397 = vmatprep.subr.mxu0 0.0
      %1398 = vmatpush1.msra.mxu0 0.0
      %1399 = vmatprep.subr.mxu0 0.0
      %1400 = vmatpush1.msra.mxu0 0.0
      %1401 = vmatprep.subr.mxu0 0.0
      %1402 = vmatpush1.msra.mxu0 0.0
      %1403 = vmatprep.subr.mxu0 0.0
      %1404 = vmatpush1.msra.mxu0 0.0
      %1405 = vmatprep.subr.mxu0 0.0
      %1406 = vmatpush1.msra.mxu0 0.0
      %1407 = vmatprep.subr.mxu0 0.0
      %1408 = vmatpush1.msra.mxu0 0.0
      %1409 = vmatprep.subr.mxu0 0.0
      %1410 = vmatpush1.msra.mxu0 0.0
      %1411 = vmatprep.subr.mxu0 0.0
      %1412 = vmatpush1.msra.mxu0 0.0
      %1413 = vmatprep.mubr.f32.mxu0 0.0
      %1414 = vmatmul.mubr.f32.gmra.mrb[0].mxu0 %v1347
      %v1415 = vpop.f32.mrb[0].mxu0
      %v1416 = vadd.f32 0.0, %v1415
      %v1417 = vpop.f32.mrb[0].mxu0
      %1418 = vdwg.mxu0
      %v1420 = vsel %vm1013, %v1177, 0
      %1422 = vmatprep.subr.mxu0 0.0
      %1423 = vmatpush1.msra.mxu0 %v1006
      %1424 = vmatprep.subr.mxu0 0.0
      %1425 = vmatpush1.msra.mxu0 0.0
      %1426 = vmatprep.subr.mxu0 0.0
      %1427 = vmatpush1.msra.mxu0 0.0
      %1428 = vmatprep.subr.mxu0 0.0
      %1429 = vmatpush1.msra.mxu0 0.0
      %1430 = vmatprep.subr.mxu0 0.0
      %1431 = vmatpush1.msra.mxu0 0.0
      %1432 = vmatprep.subr.mxu0 0.0
      %1433 = vmatpush1.msra.mxu0 0.0
      %1434 = vmatprep.subr.mxu0 0.0
      %1435 = vmatpush1.msra.mxu0 0.0
      %1436 = vmatprep.subr.mxu0 0.0
      %1437 = vmatpush1.msra.mxu0 0.0
      %1438 = vmatprep.subr.mxu0 0.0
      %1439 = vmatpush1.msra.mxu0 0.0
      %1440 = vmatprep.subr.mxu0 0.0
      %1441 = vmatpush1.msra.mxu0 0.0
      %1442 = vmatprep.subr.mxu0 0.0
      %1443 = vmatpush1.msra.mxu0 0.0
      %1444 = vmatprep.subr.mxu0 0.0
      %1445 = vmatpush1.msra.mxu0 0.0
      %1446 = vmatprep.subr.mxu0 0.0
      %1447 = vmatpush1.msra.mxu0 0.0
      %1448 = vmatprep.subr.mxu0 0.0
      %1449 = vmatpush1.msra.mxu0 0.0
      %1450 = vmatprep.subr.mxu0 0.0
      %1451 = vmatpush1.msra.mxu0 0.0
      %1452 = vmatprep.subr.mxu0 0.0
      %1453 = vmatpush1.msra.mxu0 0.0
      %1454 = vmatprep.subr.mxu0 0.0
      %1455 = vmatpush1.msra.mxu0 0.0
      %1456 = vmatprep.subr.mxu0 0.0
      %1457 = vmatpush1.msra.mxu0 0.0
      %1458 = vmatprep.subr.mxu0 0.0
      %1459 = vmatpush1.msra.mxu0 0.0
      %1460 = vmatprep.subr.mxu0 0.0
      %1461 = vmatpush1.msra.mxu0 0.0
      %1462 = vmatprep.subr.mxu0 0.0
      %1463 = vmatpush1.msra.mxu0 0.0
      %1464 = vmatprep.subr.mxu0 0.0
      %1465 = vmatpush1.msra.mxu0 0.0
      %1466 = vmatprep.subr.mxu0 0.0
      %1467 = vmatpush1.msra.mxu0 0.0
      %1468 = vmatprep.subr.mxu0 0.0
      %1469 = vmatpush1.msra.mxu0 0.0
      %1470 = vmatprep.subr.mxu0 0.0
      %1471 = vmatpush1.msra.mxu0 0.0
      %1472 = vmatprep.subr.mxu0 0.0
      %1473 = vmatpush1.msra.mxu0 0.0
      %1474 = vmatprep.subr.mxu0 0.0
      %1475 = vmatpush1.msra.mxu0 0.0
      %1476 = vmatprep.subr.mxu0 0.0
      %1477 = vmatpush1.msra.mxu0 0.0
      %1478 = vmatprep.subr.mxu0 0.0
      %1479 = vmatpush1.msra.mxu0 0.0
      %1480 = vmatprep.subr.mxu0 0.0
      %1481 = vmatpush1.msra.mxu0 0.0
      %1482 = vmatprep.subr.mxu0 0.0
      %1483 = vmatpush1.msra.mxu0 0.0
      %1484 = vmatprep.subr.mxu0 0.0
      %1485 = vmatpush1.msra.mxu0 0.0
      %1486 = vmatprep.mubr.f32.mxu0 0.0
      %1487 = vmatmul.mubr.f32.gmra.mrb[0].mxu0 %v1420
      %v1488 = vpop.f32.mrb[0].mxu0
      %v1489 = vadd.f32 %v1416, %v1488
      %v1490 = vpop.f32.mrb[0].mxu0
      %1491 = vdwg.mxu0
      %1492 = vrot.lane.b32.xlu0 %v1005, 112
      %v1493 = vpop.permute.xlu0 %1492
      %1494 = vrot.lane.b32.xlu0 %v1002, 80
      %v1495 = vpop.permute.xlu0 %1494
      %v1496 = vsel %vm1013, %v1493, 0
      %v1498 = vsel %vm1013, %v1495, 0
      %1500 = vmatprep.subr.mxu0 0.0
      %1501 = vmatpush1.xpose.msra.mxu0 %v1498
      %1502 = vmatprep.subr.mxu0 0.0
      %1503 = vmatpush1.xpose.msra.mxu0 0.0
      %1504 = vmatprep.subr.mxu0 0.0
      %1505 = vmatpush1.xpose.msra.mxu0 0.0
      %1506 = vmatprep.subr.mxu0 0.0
      %1507 = vmatpush1.xpose.msra.mxu0 0.0
      %1508 = vmatprep.subr.mxu0 0.0
      %1509 = vmatpush1.xpose.msra.mxu0 0.0
      %1510 = vmatprep.subr.mxu0 0.0
      %1511 = vmatpush1.xpose.msra.mxu0 0.0
      %1512 = vmatprep.subr.mxu0 0.0
      %1513 = vmatpush1.xpose.msra.mxu0 0.0
      %1514 = vmatprep.subr.mxu0 0.0
      %1515 = vmatpush1.xpose.msra.mxu0 0.0
      %1516 = vmatprep.subr.mxu0 0.0
      %1517 = vmatpush1.xpose.msra.mxu0 0.0
      %1518 = vmatprep.subr.mxu0 0.0
      %1519 = vmatpush1.xpose.msra.mxu0 0.0
      %1520 = vmatprep.subr.mxu0 0.0
      %1521 = vmatpush1.xpose.msra.mxu0 0.0
      %1522 = vmatprep.subr.mxu0 0.0
      %1523 = vmatpush1.xpose.msra.mxu0 0.0
      %1524 = vmatprep.subr.mxu0 0.0
      %1525 = vmatpush1.xpose.msra.mxu0 0.0
      %1526 = vmatprep.subr.mxu0 0.0
      %1527 = vmatpush1.xpose.msra.mxu0 0.0
      %1528 = vmatprep.subr.mxu0 0.0
      %1529 = vmatpush1.xpose.msra.mxu0 0.0
      %1530 = vmatprep.subr.mxu0 0.0
      %1531 = vmatpush1.xpose.msra.mxu0 0.0
      %1532 = vmatprep.subr.mxu0 0.0
      %1533 = vmatpush1.xpose.msra.mxu0 0.0
      %1534 = vmatprep.subr.mxu0 0.0
      %1535 = vmatpush1.xpose.msra.mxu0 0.0
      %1536 = vmatprep.subr.mxu0 0.0
      %1537 = vmatpush1.xpose.msra.mxu0 0.0
      %1538 = vmatprep.subr.mxu0 0.0
      %1539 = vmatpush1.xpose.msra.mxu0 0.0
      %1540 = vmatprep.subr.mxu0 0.0
      %1541 = vmatpush1.xpose.msra.mxu0 0.0
      %1542 = vmatprep.subr.mxu0 0.0
      %1543 = vmatpush1.xpose.msra.mxu0 0.0
      %1544 = vmatprep.subr.mxu0 0.0
      %1545 = vmatpush1.xpose.msra.mxu0 0.0
      %1546 = vmatprep.subr.mxu0 0.0
      %1547 = vmatpush1.xpose.msra.mxu0 0.0
      %1548 = vmatprep.subr.mxu0 0.0
      %1549 = vmatpush1.xpose.msra.mxu0 0.0
      %1550 = vmatprep.subr.mxu0 0.0
      %1551 = vmatpush1.xpose.msra.mxu0 0.0
      %1552 = vmatprep.subr.mxu0 0.0
      %1553 = vmatpush1.xpose.msra.mxu0 0.0
      %1554 = vmatprep.subr.mxu0 0.0
      %1555 = vmatpush1.xpose.msra.mxu0 0.0
      %1556 = vmatprep.subr.mxu0 0.0
      %1557 = vmatpush1.xpose.msra.mxu0 0.0
      %1558 = vmatprep.subr.mxu0 0.0
      %1559 = vmatpush1.xpose.msra.mxu0 0.0
      %1560 = vmatprep.subr.mxu0 0.0
      %1561 = vmatpush1.xpose.msra.mxu0 0.0
      %1562 = vmatprep.subr.mxu0 0.0
      %1563 = vmatpush1.xpose.msra.mxu0 0.0
      %1564 = vmatprep.mubr.f32.mxu0 0.0
      %1565 = vmatmul.mubr.f32.gmra.mrb[0].mxu0 %v1496
      %v1566 = vpop.f32.mrb[0].mxu0
      %v1567 = vadd.f32 0.0, %v1566
      %v1568 = vpop.f32.mrb[0].mxu0
      %1569 = vdwg.mxu0
      %v1570 = vsel %vm1089, %v1567, -inf
      %1571 = vmax.xlane.f32.xlu0 %v1570
      %v1572 = vpop.xlane.xlu0 %1571
      %v1573 = vsub.f32 %v1567, %v1572
      %v1574 = vmul.f32 %v1573, 1.442695
      %v1575 = vpow.pop %v1574
      %v1576 = vsel %vm1089, %v1575, 0.0
      %1577 = vadd.xlane.f32.xlu0 %v1576
      %v1578 = vpop.xlane.xlu0 %1577
      %v1579 = vrcp.pop %v1578
      %v1580 = vmul.f32 %v1575, %v1579
      %1581 = vrot.lane.b32.xlu0 %v1002, 48
      %v1582 = vpop.permute.xlu0 %1581
      %v1584 = vsel %vm1103, %v1580, 0
      %v1586 = vsel %vm1107, %v1582, 0
      %1588 = vmatprep.subr.mxu0 0.0
      %1589 = vmatpush1.msra.mxu0 %v1586
      %1590 = vmatprep.subr.mxu0 0.0
      %1591 = vmatpush1.msra.mxu0 0.0
      %1592 = vmatprep.subr.mxu0 0.0
      %1593 = vmatpush1.msra.mxu0 0.0
      %1594 = vmatprep.subr.mxu0 0.0
      %1595 = vmatpush1.msra.mxu0 0.0
      %1596 = vmatprep.subr.mxu0 0.0
      %1597 = vmatpush1.msra.mxu0 0.0
      %1598 = vmatprep.subr.mxu0 0.0
      %1599 = vmatpush1.msra.mxu0 0.0
      %1600 = vmatprep.subr.mxu0 0.0
      %1601 = vmatpush1.msra.mxu0 0.0
      %1602 = vmatprep.subr.mxu0 0.0
      %1603 = vmatpush1.msra.mxu0 0.0
      %1604 = vmatprep.subr.mxu0 0.0
      %1605 = vmatpush1.msra.mxu0 0.0
      %1606 = vmatprep.subr.mxu0 0.0
      %1607 = vmatpush1.msra.mxu0 0.0
      %1608 = vmatprep.subr.mxu0 0.0
      %1609 = vmatpush1.msra.mxu0 0.0
      %1610 = vmatprep.subr.mxu0 0.0
      %1611 = vmatpush1.msra.mxu0 0.0
      %1612 = vmatprep.subr.mxu0 0.0
      %1613 = vmatpush1.msra.mxu0 0.0
      %1614 = vmatprep.subr.mxu0 0.0
      %1615 = vmatpush1.msra.mxu0 0.0
      %1616 = vmatprep.subr.mxu0 0.0
      %1617 = vmatpush1.msra.mxu0 0.0
      %1618 = vmatprep.subr.mxu0 0.0
      %1619 = vmatpush1.msra.mxu0 0.0
      %1620 = vmatprep.subr.mxu0 0.0
      %1621 = vmatpush1.msra.mxu0 0.0
      %1622 = vmatprep.subr.mxu0 0.0
      %1623 = vmatpush1.msra.mxu0 0.0
      %1624 = vmatprep.subr.mxu0 0.0
      %1625 = vmatpush1.msra.mxu0 0.0
      %1626 = vmatprep.subr.mxu0 0.0
      %1627 = vmatpush1.msra.mxu0 0.0
      %1628 = vmatprep.subr.mxu0 0.0
      %1629 = vmatpush1.msra.mxu0 0.0
      %1630 = vmatprep.subr.mxu0 0.0
      %1631 = vmatpush1.msra.mxu0 0.0
      %1632 = vmatprep.subr.mxu0 0.0
      %1633 = vmatpush1.msra.mxu0 0.0
      %1634 = vmatprep.subr.mxu0 0.0
      %1635 = vmatpush1.msra.mxu0 0.0
      %1636 = vmatprep.subr.mxu0 0.0
      %1637 = vmatpush1.msra.mxu0 0.0
      %1638 = vmatprep.subr.mxu0 0.0
      %1639 = vmatpush1.msra.mxu0 0.0
      %1640 = vmatprep.subr.mxu0 0.0
      %1641 = vmatpush1.msra.mxu0 0.0
      %1642 = vmatprep.subr.mxu0 0.0
      %1643 = vmatpush1.msra.mxu0 0.0
      %1644 = vmatprep.subr.mxu0 0.0
      %1645 = vmatpush1.msra.mxu0 0.0
      %1646 = vmatprep.subr.mxu0 0.0
      %1647 = vmatpush1.msra.mxu0 0.0
      %1648 = vmatprep.subr.mxu0 0.0
      %1649 = vmatpush1.msra.mxu0 0.0
      %1650 = vmatprep.subr.mxu0 0.0
      %1651 = vmatpush1.msra.mxu0 0.0
      %1652 = vmatprep.mubr.f32.mxu0 0.0
      %1653 = vmatmul.mubr.f32.gmra.mrb[0].mxu0 %v1584
      %v1654 = vpop.f32.mrb[0].mxu0
      %v1655 = vadd.f32 0.0, %v1654
      %v1656 = vpop.f32.mrb[0].mxu0
      %1657 = vdwg.mxu0
      %v1659 = vsel %vm1013, %v1655, 0
      %1661 = vmatprep.subr.mxu0 0.0
      %1662 = vmatpush1.msra.mxu0 %v1008
      %1663 = vmatprep.subr.mxu0 0.0
      %1664 = vmatpush1.msra.mxu0 0.0
      %1665 = vmatprep.subr.mxu0 0.0
      %1666 = vmatpush1.msra.mxu0 0.0
      %1667 = vmatprep.subr.mxu0 0.0
      %1668 = vmatpush1.msra.mxu0 0.0
      %1669 = vmatprep.subr.mxu0 0.0
      %1670 = vmatpush1.msra.mxu0 0.0
      %1671 = vmatprep.subr.mxu0 0.0
      %1672 = vmatpush1.msra.mxu0 0.0
      %1673 = vmatprep.subr.mxu0 0.0
      %1674 = vmatpush1.msra.mxu0 0.0
      %1675 = vmatprep.subr.mxu0 0.0
      %1676 = vmatpush1.msra.mxu0 0.0
      %1677 = vmatprep.subr.mxu0 0.0
      %1678 = vmatpush1.msra.mxu0 0.0
      %1679 = vmatprep.subr.mxu0 0.0
      %1680 = vmatpush1.msra.mxu0 0.0
      %1681 = vmatprep.subr.mxu0 0.0
      %1682 = vmatpush1.msra.mxu0 0.0
      %1683 = vmatprep.subr.mxu0 0.0
      %1684 = vmatpush1.msra.mxu0 0.0
      %1685 = vmatprep.subr.mxu0 0.0
      %1686 = vmatpush1.msra.mxu0 0.0
      %1687 = vmatprep.subr.mxu0 0.0
      %1688 = vmatpush1.msra.mxu0 0.0
      %1689 = vmatprep.subr.mxu0 0.0
      %1690 = vmatpush1.msra.mxu0 0.0
      %1691 = vmatprep.subr.mxu0 0.0
      %1692 = vmatpush1.msra.mxu0 0.0
      %1693 = vmatprep.subr.mxu0 0.0
      %1694 = vmatpush1.msra.mxu0 0.0
      %1695 = vmatprep.subr.mxu0 0.0
      %1696 = vmatpush1.msra.mxu0 0.0
      %1697 = vmatprep.subr.mxu0 0.0
      %1698 = vmatpush1.msra.mxu0 0.0
      %1699 = vmatprep.subr.mxu0 0.0
      %1700 = vmatpush1.msra.mxu0 0.0
      %1701 = vmatprep.subr.mxu0 0.0
      %1702 = vmatpush1.msra.mxu0 0.0
      %1703 = vmatprep.subr.mxu0 0.0
      %1704 = vmatpush1.msra.mxu0 0.0
      %1705 = vmatprep.subr.mxu0 0.0
      %1706 = vmatpush1.msra.mxu0 0.0
      %1707 = vmatprep.subr.mxu0 0.0
      %1708 = vmatpush1.msra.mxu0 0.0
      %1709 = vmatprep.subr.mxu0 0.0
      %1710 = vmatpush1.msra.mxu0 0.0
      %1711 = vmatprep.subr.mxu0 0.0
      %1712 = vmatpush1.msra.mxu0 0.0
      %1713 = vmatprep.subr.mxu0 0.0
      %1714 = vmatpush1.msra.mxu0 0.0
      %1715 = vmatprep.subr.mxu0 0.0
      %1716 = vmatpush1.msra.mxu0 0.0
      %1717 = vmatprep.subr.mxu0 0.0
      %1718 = vmatpush1.msra.mxu0 0.0
      %1719 = vmatprep.subr.mxu0 0.0
      %1720 = vmatpush1.msra.mxu0 0.0
      %1721 = vmatprep.subr.mxu0 0.0
      %1722 = vmatpush1.msra.mxu0 0.0
      %1723 = vmatprep.subr.mxu0 0.0
      %1724 = vmatpush1.msra.mxu0 0.0
      %1725 = vmatprep.mubr.f32.mxu0 0.0
      %1726 = vmatmul.mubr.f32.gmra.mrb[0].mxu0 %v1659
      %v1727 = vpop.f32.mrb[0].mxu0
      %v1728 = vadd.f32 0.0, %v1727
      %v1729 = vpop.f32.mrb[0].mxu0
      %1730 = vdwg.mxu0
      %v1731 = vadd.f32 %v1489, %v1728
      %1732 = vrot.lane.b32.xlu0 %v1005, 104
      %v1733 = vpop.permute.xlu0 %1732
      %1734 = vrot.lane.b32.xlu0 %v1002, 72
      %v1735 = vpop.permute.xlu0 %1734
      %v1736 = vsel %vm1013, %v1733, 0
      %v1738 = vsel %vm1013, %v1735, 0
      %1740 = vmatprep.subr.mxu0 0.0
      %1741 = vmatpush1.xpose.msra.mxu0 %v1738
      %1742 = vmatprep.subr.mxu0 0.0
      %1743 = vmatpush1.xpose.msra.mxu0 0.0
      %1744 = vmatprep.subr.mxu0 0.0
      %1745 = vmatpush1.xpose.msra.mxu0 0.0
      %1746 = vmatprep.subr.mxu0 0.0
      %1747 = vmatpush1.xpose.msra.mxu0 0.0
      %1748 = vmatprep.subr.mxu0 0.0
      %1749 = vmatpush1.xpose.msra.mxu0 0.0
      %1750 = vmatprep.subr.mxu0 0.0
      %1751 = vmatpush1.xpose.msra.mxu0 0.0
      %1752 = vmatprep.subr.mxu0 0.0
      %1753 = vmatpush1.xpose.msra.mxu0 0.0
      %1754 = vmatprep.subr.mxu0 0.0
      %1755 = vmatpush1.xpose.msra.mxu0 0.0
      %1756 = vmatprep.subr.mxu0 0.0
      %1757 = vmatpush1.xpose.msra.mxu0 0.0
      %1758 = vmatprep.subr.mxu0 0.0
      %1759 = vmatpush1.xpose.msra.mxu0 0.0
      %1760 = vmatprep.subr.mxu0 0.0
      %1761 = vmatpush1.xpose.msra.mxu0 0.0
      %1762 = vmatprep.subr.mxu0 0.0
      %1763 = vmatpush1.xpose.msra.mxu0 0.0
      %1764 = vmatprep.subr.mxu0 0.0
      %1765 = vmatpush1.xpose.msra.mxu0 0.0
      %1766 = vmatprep.subr.mxu0 0.0
      %1767 = vmatpush1.xpose.msra.mxu0 0.0
      %1768 = vmatprep.subr.mxu0 0.0
      %1769 = vmatpush1.xpose.msra.mxu0 0.0
      %1770 = vmatprep.subr.mxu0 0.0
      %1771 = vmatpush1.xpose.msra.mxu0 0.0
      %1772 = vmatprep.subr.mxu0 0.0
      %1773 = vmatpush1.xpose.msra.mxu0 0.0
      %1774 = vmatprep.subr.mxu0 0.0
      %1775 = vmatpush1.xpose.msra.mxu0 0.0
      %1776 = vmatprep.subr.mxu0 0.0
      %1777 = vmatpush1.xpose.msra.mxu0 0.0
      %1778 = vmatprep.subr.mxu0 0.0
      %1779 = vmatpush1.xpose.msra.mxu0 0.0
      %1780 = vmatprep.subr.mxu0 0.0
      %1781 = vmatpush1.xpose.msra.mxu0 0.0
      %1782 = vmatprep.subr.mxu0 0.0
      %1783 = vmatpush1.xpose.msra.mxu0 0.0
      %1784 = vmatprep.subr.mxu0 0.0
      %1785 = vmatpush1.xpose.msra.mxu0 0.0
      %1786 = vmatprep.subr.mxu0 0.0
      %1787 = vmatpush1.xpose.msra.mxu0 0.0
      %1788 = vmatprep.subr.mxu0 0.0
      %1789 = vmatpush1.xpose.msra.mxu0 0.0
      %1790 = vmatprep.subr.mxu0 0.0
      %1791 = vmatpush1.xpose.msra.mxu0 0.0
      %1792 = vmatprep.subr.mxu0 0.0
      %1793 = vmatpush1.xpose.msra.mxu0 0.0
      %1794 = vmatprep.subr.mxu0 0.0
      %1795 = vmatpush1.xpose.msra.mxu0 0.0
      %1796 = vmatprep.subr.mxu0 0.0
      %1797 = vmatpush1.xpose.msra.mxu0 0.0
      %1798 = vmatprep.subr.mxu0 0.0
      %1799 = vmatpush1.xpose.msra.mxu0 0.0
      %1800 = vmatprep.subr.mxu0 0.0
      %1801 = vmatpush1.xpose.msra.mxu0 0.0
      %1802 = vmatprep.subr.mxu0 0.0
      %1803 = vmatpush1.xpose.msra.mxu0 0.0
      %1804 = vmatprep.mubr.f32.mxu0 0.0
      %1805 = vmatmul.mubr.f32.gmra.mrb[0].mxu0 %v1736
      %v1806 = vpop.f32.mrb[0].mxu0
      %v1807 = vadd.f32 0.0, %v1806
      %v1808 = vpop.f32.mrb[0].mxu0
      %1809 = vdwg.mxu0
      %v1810 = vsel %vm1089, %v1807, -inf
      %1811 = vmax.xlane.f32.xlu0 %v1810
      %v1812 = vpop.xlane.xlu0 %1811
      %v1813 = vsub.f32 %v1807, %v1812
      %v1814 = vmul.f32 %v1813, 1.442695
      %v1815 = vpow.pop %v1814
      %v1816 = vsel %vm1089, %v1815, 0.0
      %1817 = vadd.xlane.f32.xlu0 %v1816
      %v1818 = vpop.xlane.xlu0 %1817
      %v1819 = vrcp.pop %v1818
      %v1820 = vmul.f32 %v1815, %v1819
      %1821 = vrot.lane.b32.xlu0 %v1002, 40
      %v1822 = vpop.permute.xlu0 %1821
      %v1824 = vsel %vm1103, %v1820, 0
      %v1826 = vsel %vm1107, %v1822, 0
      %1828 = vmatprep.subr.mxu0 0.0
      %1829 = vmatpush1.msra.mxu0 %v1826
      %1830 = vmatprep.subr.mxu0 0.0
      %1831 = vmatpush1.msra.mxu0 0.0
      %1832 = vmatprep.subr.mxu0 0.0
      %1833 = vmatpush1.msra.mxu0 0.0
      %1834 = vmatprep.subr.mxu0 0.0
      %1835 = vmatpush1.msra.mxu0 0.0
      %1836 = vmatprep.subr.mxu0 0.0
      %1837 = vmatpush1.msra.mxu0 0.0
      %1838 = vmatprep.subr.mxu0 0.0
      %1839 = vmatpush1.msra.mxu0 0.0
      %1840 = vmatprep.subr.mxu0 0.0
      %1841 = vmatpush1.msra.mxu0 0.0
      %1842 = vmatprep.subr.mxu0 0.0
      %1843 = vmatpush1.msra.mxu0 0.0
      %1844 = vmatprep.subr.mxu0 0.0
      %1845 = vmatpush1.msra.mxu0 0.0
      %1846 = vmatprep.subr.mxu0 0.0
      %1847 = vmatpush1.msra.mxu0 0.0
      %1848 = vmatprep.subr.mxu0 0.0
      %1849 = vmatpush1.msra.mxu0 0.0
      %1850 = vmatprep.subr.mxu0 0.0
      %1851 = vmatpush1.msra.mxu0 0.0
      %1852 = vmatprep.subr.mxu0 0.0
      %1853 = vmatpush1.msra.mxu0 0.0
      %1854 = vmatprep.subr.mxu0 0.0
      %1855 = vmatpush1.msra.mxu0 0.0
      %1856 = vmatprep.subr.mxu0 0.0
      %1857 = vmatpush1.msra.mxu0 0.0
      %1858 = vmatprep.subr.mxu0 0.0
      %1859 = vmatpush1.msra.mxu0 0.0
      %1860 = vmatprep.subr.mxu0 0.0
      %1861 = vmatpush1.msra.mxu0 0.0
      %1862 = vmatprep.subr.mxu0 0.0
      %1863 = vmatpush1.msra.mxu0 0.0
      %1864 = vmatprep.subr.mxu0 0.0
      %1865 = vmatpush1.msra.mxu0 0.0
      %1866 = vmatprep.subr.mxu0 0.0
      %1867 = vmatpush1.msra.mxu0 0.0
      %1868 = vmatprep.subr.mxu0 0.0
      %1869 = vmatpush1.msra.mxu0 0.0
      %1870 = vmatprep.subr.mxu0 0.0
      %1871 = vmatpush1.msra.mxu0 0.0
      %1872 = vmatprep.subr.mxu0 0.0
      %1873 = vmatpush1.msra.mxu0 0.0
      %1874 = vmatprep.subr.mxu0 0.0
      %1875 = vmatpush1.msra.mxu0 0.0
      %1876 = vmatprep.subr.mxu0 0.0
      %1877 = vmatpush1.msra.mxu0 0.0
      %1878 = vmatprep.subr.mxu0 0.0
      %1879 = vmatpush1.msra.mxu0 0.0
      %1880 = vmatprep.subr.mxu0 0.0
      %1881 = vmatpush1.msra.mxu0 0.0
      %1882 = vmatprep.subr.mxu0 0.0
      %1883 = vmatpush1.msra.mxu0 0.0
      %1884 = vmatprep.subr.mxu0 0.0
      %1885 = vmatpush1.msra.mxu0 0.0
      %1886 = vmatprep.subr.mxu0 0.0
      %1887 = vmatpush1.msra.mxu0 0.0
      %1888 = vmatprep.subr.mxu0 0.0
      %1889 = vmatpush1.msra.mxu0 0.0
      %1890 = vmatprep.subr.mxu0 0.0
      %1891 = vmatpush1.msra.mxu0 0.0
      %1892 = vmatprep.mubr.f32.mxu0 0.0
      %1893 = vmatmul.mubr.f32.gmra.mrb[0].mxu0 %v1824
      %v1894 = vpop.f32.mrb[0].mxu0
      %v1895 = vadd.f32 0.0, %v1894
      %v1896 = vpop.f32.mrb[0].mxu0
      %1897 = vdwg.mxu0
      %v1899 = vsel %vm1013, %v1895, 0
      %1901 = vmatprep.subr.mxu0 0.0
      %1902 = vmatpush1.msra.mxu0 %v1009
      %1903 = vmatprep.subr.mxu0 0.0
      %1904 = vmatpush1.msra.mxu0 0.0
      %1905 = vmatprep.subr.mxu0 0.0
      %1906 = vmatpush1.msra.mxu0 0.0
      %1907 = vmatprep.subr.mxu0 0.0
      %1908 = vmatpush1.msra.mxu0 0.0
      %1909 = vmatprep.subr.mxu0 0.0
      %1910 = vmatpush1.msra.mxu0 0.0
      %1911 = vmatprep.subr.mxu0 0.0
      %1912 = vmatpush1.msra.mxu0 0.0
      %1913 = vmatprep.subr.mxu0 0.0
      %1914 = vmatpush1.msra.mxu0 0.0
      %1915 = vmatprep.subr.mxu0 0.0
      %1916 = vmatpush1.msra.mxu0 0.0
      %1917 = vmatprep.subr.mxu0 0.0
      %1918 = vmatpush1.msra.mxu0 0.0
      %1919 = vmatprep.subr.mxu0 0.0
      %1920 = vmatpush1.msra.mxu0 0.0
      %1921 = vmatprep.subr.mxu0 0.0
      %1922 = vmatpush1.msra.mxu0 0.0
      %1923 = vmatprep.subr.mxu0 0.0
      %1924 = vmatpush1.msra.mxu0 0.0
      %1925 = vmatprep.subr.mxu0 0.0
      %1926 = vmatpush1.msra.mxu0 0.0
      %1927 = vmatprep.subr.mxu0 0.0
      %1928 = vmatpush1.msra.mxu0 0.0
      %1929 = vmatprep.subr.mxu0 0.0
      %1930 = vmatpush1.msra.mxu0 0.0
      %1931 = vmatprep.subr.mxu0 0.0
      %1932 = vmatpush1.msra.mxu0 0.0
      %1933 = vmatprep.subr.mxu0 0.0
      %1934 = vmatpush1.msra.mxu0 0.0
      %1935 = vmatprep.subr.mxu0 0.0
      %1936 = vmatpush1.msra.mxu0 0.0
      %1937 = vmatprep.subr.mxu0 0.0
      %1938 = vmatpush1.msra.mxu0 0.0
      %1939 = vmatprep.subr.mxu0 0.0
      %1940 = vmatpush1.msra.mxu0 0.0
      %1941 = vmatprep.subr.mxu0 0.0
      %1942 = vmatpush1.msra.mxu0 0.0
      %1943 = vmatprep.subr.mxu0 0.0
      %1944 = vmatpush1.msra.mxu0 0.0
      %1945 = vmatprep.subr.mxu0 0.0
      %1946 = vmatpush1.msra.mxu0 0.0
      %1947 = vmatprep.subr.mxu0 0.0
      %1948 = vmatpush1.msra.mxu0 0.0
      %1949 = vmatprep.subr.mxu0 0.0
      %1950 = vmatpush1.msra.mxu0 0.0
      %1951 = vmatprep.subr.mxu0 0.0
      %1952 = vmatpush1.msra.mxu0 0.0
      %1953 = vmatprep.subr.mxu0 0.0
      %1954 = vmatpush1.msra.mxu0 0.0
      %1955 = vmatprep.subr.mxu0 0.0
      %1956 = vmatpush1.msra.mxu0 0.0
      %1957 = vmatprep.subr.mxu0 0.0
      %1958 = vmatpush1.msra.mxu0 0.0
      %1959 = vmatprep.subr.mxu0 0.0
      %1960 = vmatpush1.msra.mxu0 0.0
      %1961 = vmatprep.subr.mxu0 0.0
      %1962 = vmatpush1.msra.mxu0 0.0
      %1963 = vmatprep.subr.mxu0 0.0
      %1964 = vmatpush1.msra.mxu0 0.0
      %1965 = vmatprep.mubr.f32.mxu0 0.0
      %1966 = vmatmul.mubr.f32.gmra.mrb[0].mxu0 %v1899
      %v1967 = vpop.f32.mrb[0].mxu0
      %v1968 = vadd.f32 0.0, %v1967
      %v1969 = vpop.f32.mrb[0].mxu0
      %1970 = vdwg.mxu0
      %v1971 = vadd.f32 %v1731, %v1968
      %v1972 = vadd.f32 %v888, %v1971
      %v1973 = vld [vmem:[%s724] sm:$0x1]
      %v1975 = vlaneseq
      %v1976 = vshrl.u32 %v1975, 7
      %v1977 = vsub.s32 0, %v1976
      %v1978 = vrot.slane %v1973, %v1977
      %v1980 = vadd.f32 %v1972, %v1978
      %v1981 = vld [vmem:[%s727] sm:$0x1]
      %v1982 = vld [vmem:[%s730] sm:$0x1]
      %v1983 = vsel %vm891, %v1980, 0.0
      %1984 = vadd.xlane.f32.xlu0 %v1983
      %v1985 = vpop.xlane.xlu0 %1984
      %v1986 = vmul.f32 %v1985, %v895
      %v1987 = vsub.f32 %v1980, %v1986
      %v1988 = vmul.f32 %v1987, %v1987
      %v1989 = vsel %vm891, %v1988, 0.0
      %1990 = vadd.xlane.f32.xlu0 %v1989
      %v1991 = vpop.xlane.xlu0 %1990
      %v1992 = vmul.f32 %v1991, %v895
      %v1993 = vadd.f32 %v1992, 1e-05
      %v1994 = vrsqrt.pop %v1993
      %v1995 = vmul.f32 %v1987, %v1994
      %v1997 = vlaneseq
      %v1998 = vshrl.u32 %v1997, 7
      %v1999 = vsub.s32 0, %v1998
      %v2000 = vrot.slane %v1981, %v1999
      %v2002 = vmul.f32 %v1995, %v2000
      %v2004 = vlaneseq
      %v2005 = vshrl.u32 %v2004, 7
      %v2006 = vsub.s32 0, %v2005
      %v2007 = vrot.slane %v1982, %v2006
      %v2009 = vadd.f32 %v2002, %v2007
      %v2010 = vld [vmem:[%s735] sm:$0xff]
      %v2011 = vld [vmem:[%s735 + $0x8] sm:$0xff]
      %v2012 = vld [vmem:[%s735 + $0x10] sm:$0xff]
      %v2013 = vld [vmem:[%s735 + $0x18] sm:$0xff]
      %v2014 = vld [vmem:[%s738] sm:$0x1]
      %v2016 = vlaneseq
      %v2017 = vshrl.u32 %v2016, 7
      %v2018 = vsub.s32 0, %v2017
      %v2019 = vrot.slane %v2014, %v2018
      %v2022 = vsel %vm931, %v2009, 0
      %2024 = vmatprep.subr.mxu0 0.0
      %2025 = vmatpush1.msra.mxu0 %v2010
      %2026 = vmatprep.subr.mxu0 0.0
      %2027 = vmatpush1.msra.mxu0 %v2011
      %2028 = vmatprep.subr.mxu0 0.0
      %2029 = vmatpush1.msra.mxu0 %v2012
      %2030 = vmatprep.subr.mxu0 0.0
      %2031 = vmatpush1.msra.mxu0 %v2013
      %2032 = vmatprep.subr.mxu0 0.0
      %2033 = vmatpush1.msra.mxu0 0.0
      %2034 = vmatprep.subr.mxu0 0.0
      %2035 = vmatpush1.msra.mxu0 0.0
      %2036 = vmatprep.subr.mxu0 0.0
      %2037 = vmatpush1.msra.mxu0 0.0
      %2038 = vmatprep.subr.mxu0 0.0
      %2039 = vmatpush1.msra.mxu0 0.0
      %2040 = vmatprep.subr.mxu0 0.0
      %2041 = vmatpush1.msra.mxu0 0.0
      %2042 = vmatprep.subr.mxu0 0.0
      %2043 = vmatpush1.msra.mxu0 0.0
      %2044 = vmatprep.subr.mxu0 0.0
      %2045 = vmatpush1.msra.mxu0 0.0
      %2046 = vmatprep.subr.mxu0 0.0
      %2047 = vmatpush1.msra.mxu0 0.0
      %2048 = vmatprep.subr.mxu0 0.0
      %2049 = vmatpush1.msra.mxu0 0.0
      %2050 = vmatprep.subr.mxu0 0.0
      %2051 = vmatpush1.msra.mxu0 0.0
      %2052 = vmatprep.subr.mxu0 0.0
      %2053 = vmatpush1.msra.mxu0 0.0
      %2054 = vmatprep.subr.mxu0 0.0
      %2055 = vmatpush1.msra.mxu0 0.0
      %2056 = vmatprep.subr.mxu0 0.0
      %2057 = vmatpush1.msra.mxu0 0.0
      %2058 = vmatprep.subr.mxu0 0.0
      %2059 = vmatpush1.msra.mxu0 0.0
      %2060 = vmatprep.subr.mxu0 0.0
      %2061 = vmatpush1.msra.mxu0 0.0
      %2062 = vmatprep.subr.mxu0 0.0
      %2063 = vmatpush1.msra.mxu0 0.0
      %2064 = vmatprep.subr.mxu0 0.0
      %2065 = vmatpush1.msra.mxu0 0.0
      %2066 = vmatprep.subr.mxu0 0.0
      %2067 = vmatpush1.msra.mxu0 0.0
      %2068 = vmatprep.subr.mxu0 0.0
      %2069 = vmatpush1.msra.mxu0 0.0
      %2070 = vmatprep.subr.mxu0 0.0
      %2071 = vmatpush1.msra.mxu0 0.0
      %2072 = vmatprep.subr.mxu0 0.0
      %2073 = vmatpush1.msra.mxu0 0.0
      %2074 = vmatprep.subr.mxu0 0.0
      %2075 = vmatpush1.msra.mxu0 0.0
      %2076 = vmatprep.subr.mxu0 0.0
      %2077 = vmatpush1.msra.mxu0 0.0
      %2078 = vmatprep.subr.mxu0 0.0
      %2079 = vmatpush1.msra.mxu0 0.0
      %2080 = vmatprep.subr.mxu0 0.0
      %2081 = vmatpush1.msra.mxu0 0.0
      %2082 = vmatprep.subr.mxu0 0.0
      %2083 = vmatpush1.msra.mxu0 0.0
      %2084 = vmatprep.subr.mxu0 0.0
      %2085 = vmatpush1.msra.mxu0 0.0
      %2086 = vmatprep.subr.mxu0 0.0
      %2087 = vmatpush1.msra.mxu0 0.0
      %2088 = vmatprep.mubr.f32.mxu0 0.0
      %2089 = vmatmul.mubr.f32.gmra.mrb[0].mxu0 %v2022
      %v2090 = vpop.f32.mrb[0].mxu0
      %v2091 = vadd.f32 %v2019, %v2090
      %v2092 = vpop.f32.mrb[0].mxu0
      %2093 = vdwg.mxu0
      %v2094 = vmul.f32 %v2091, 0.5
      %v2095 = vmul.f32 %v2091, 0.044715
      %v2096 = vmul.f32 %v2095, %v2091
      %v2097 = vmul.f32 %v2096, %v2091
      %v2098 = vadd.f32 %v2091, %v2097
      %v2099 = vmul.f32 %v2098, 0.7978846
      %v2100 = vtanh.pop %v2099
      %v2101 = vadd.f32 %v2100, 1.0
      %v2102 = vmul.f32 %v2094, %v2101
      %v2103 = vld [vmem:[%s743] sm:$0xff]
      %v2104 = vld [vmem:[%s743 + $0x8] sm:$0xff]
      %v2105 = vld [vmem:[%s743 + $0x10] sm:$0xff]
      %v2106 = vld [vmem:[%s743 + $0x18] sm:$0xff]
      %v2107 = vld [vmem:[%s743 + $0x20] sm:$0xff]
      %v2108 = vld [vmem:[%s743 + $0x28] sm:$0xff]
      %v2109 = vld [vmem:[%s743 + $0x30] sm:$0xff]
      %v2110 = vld [vmem:[%s743 + $0x38] sm:$0xff]
      %v2111 = vld [vmem:[%s746] sm:$0x1]
      %v2113 = vlaneseq
      %v2114 = vshrl.u32 %v2113, 7
      %v2115 = vsub.s32 0, %v2114
      %v2116 = vrot.slane %v2111, %v2115
      %vm2118 = vcmask 523264
      %v2120 = vsel %vm2118, %v2102, 0
      %2122 = vmatprep.subr.mxu0 0.0
      %2123 = vmatpush1.msra.mxu0 %v2103
      %2124 = vmatprep.subr.mxu0 0.0
      %2125 = vmatpush1.msra.mxu0 %v2104
      %2126 = vmatprep.subr.mxu0 0.0
      %2127 = vmatpush1.msra.mxu0 %v2105
      %2128 = vmatprep.subr.mxu0 0.0
      %2129 = vmatpush1.msra.mxu0 %v2106
      %2130 = vmatprep.subr.mxu0 0.0
      %2131 = vmatpush1.msra.mxu0 %v2107
      %2132 = vmatprep.subr.mxu0 0.0
      %2133 = vmatpush1.msra.mxu0 %v2108
      %2134 = vmatprep.subr.mxu0 0.0
      %2135 = vmatpush1.msra.mxu0 %v2109
      %2136 = vmatprep.subr.mxu0 0.0
      %2137 = vmatpush1.msra.mxu0 %v2110
      %2138 = vmatprep.subr.mxu0 0.0
      %2139 = vmatpush1.msra.mxu0 0.0
      %2140 = vmatprep.subr.mxu0 0.0
      %2141 = vmatpush1.msra.mxu0 0.0
      %2142 = vmatprep.subr.mxu0 0.0
      %2143 = vmatpush1.msra.mxu0 0.0
      %2144 = vmatprep.subr.mxu0 0.0
      %2145 = vmatpush1.msra.mxu0 0.0
      %2146 = vmatprep.subr.mxu0 0.0
      %2147 = vmatpush1.msra.mxu0 0.0
      %2148 = vmatprep.subr.mxu0 0.0
      %2149 = vmatpush1.msra.mxu0 0.0
      %2150 = vmatprep.subr.mxu0 0.0
      %2151 = vmatpush1.msra.mxu0 0.0
      %2152 = vmatprep.subr.mxu0 0.0
      %2153 = vmatpush1.msra.mxu0 0.0
      %2154 = vmatprep.subr.mxu0 0.0
      %2155 = vmatpush1.msra.mxu0 0.0
      %2156 = vmatprep.subr.mxu0 0.0
      %2157 = vmatpush1.msra.mxu0 0.0
      %2158 = vmatprep.subr.mxu0 0.0
      %2159 = vmatpush1.msra.mxu0 0.0
      %2160 = vmatprep.subr.mxu0 0.0
      %2161 = vmatpush1.msra.mxu0 0.0
      %2162 = vmatprep.subr.mxu0 0.0
      %2163 = vmatpush1.msra.mxu0 0.0
      %2164 = vmatprep.subr.mxu0 0.0
      %2165 = vmatpush1.msra.mxu0 0.0
      %2166 = vmatprep.subr.mxu0 0.0
      %2167 = vmatpush1.msra.mxu0 0.0
      %2168 = vmatprep.subr.mxu0 0.0
      %2169 = vmatpush1.msra.mxu0 0.0
      %2170 = vmatprep.subr.mxu0 0.0
      %2171 = vmatpush1.msra.mxu0 0.0
      %2172 = vmatprep.subr.mxu0 0.0
      %2173 = vmatpush1.msra.mxu0 0.0
      %2174 = vmatprep.subr.mxu0 0.0
      %2175 = vmatpush1.msra.mxu0 0.0
      %2176 = vmatprep.subr.mxu0 0.0
      %2177 = vmatpush1.msra.mxu0 0.0
      %2178 = vmatprep.subr.mxu0 0.0
      %2179 = vmatpush1.msra.mxu0 0.0
      %2180 = vmatprep.subr.mxu0 0.0
      %2181 = vmatpush1.msra.mxu0 0.0
      %2182 = vmatprep.subr.mxu0 0.0
      %2183 = vmatpush1.msra.mxu0 0.0
      %2184 = vmatprep.subr.mxu0 0.0
      %2185 = vmatpush1.msra.mxu0 0.0
      %2186 = vmatprep.mubr.f32.mxu0 0.0
      %2187 = vmatmul.mubr.f32.gmra.mrb[0].mxu0 %v2120
      %v2188 = vpop.f32.mrb[0].mxu0
      %v2189 = vadd.f32 %v2116, %v2188
      %v2190 = vpop.f32.mrb[0].mxu0
      %2191 = vdwg.mxu0
      %v2192 = vadd.f32 %v1980, %v2189
      %2193 = vst.msk [vmem:[%s750] sm:$0x1f] %vm891, %v2192
      %p2194 = scmp.lt.s32.totalorder %s32, 1
      %s2195 = scalar_select %p2194, %s32, 1
      %s2196 = smul.addr %s2195, 8
      %s2197 = scalar_lea.vmem %s17, %s2196
      // Predicated region
      $region93: #{tpu_custom_call.1} parent=87 // pred_check
        %p2198 = pneg %p480
      $region94: #{tpu_custom_call.1} parent=87 // pred_check_branch
        %2200 = sbr.rel (%p2198) target = $region96
      $region95: #{tpu_custom_call.1} parent=87 // pred_region
        _
      $region96: #{tpu_custom_call.1} parent=87 // pred_fallthru
        _
    $region88: #{tpu_custom_call.1} parent=5 // pred_fallthru
      _
    %p2201 = scmp.le.s32.totalorder 2, %s23
    // Predicated region
    $region97: #{tpu_custom_call.1} parent=5 // pred_check
      %p2202 = pneg %p2201
    $region98: #{tpu_custom_call.1} parent=5 // pred_check_branch
      %2204 = sbr.rel (%p2202) target = $region100
    $region99: #{tpu_custom_call.1} parent=5 // pred_region
      %s2205 = ssub.s32 %s23, 2
      // Predicated region
      $region101: #{tpu_custom_call.1} parent=99 // pred_check
        %p2206 = pneg %p486
      $region102: #{tpu_custom_call.1} parent=99 // pred_check_branch
        %2208 = sbr.rel (%p2206) target = $region104
      $region103: #{tpu_custom_call.1} parent=99 // pred_region
        %p2209 = scmp.lt.s32.totalorder %s34, 1
        %s2210 = scalar_select %p2209, %s34, 1
        %s2211 = smul.addr %s2210, 8
        %s2212 = scalar_lea.vmem %s17, %s2211
      $region104: #{tpu_custom_call.1} parent=99 // pred_fallthru
        _
    $region100: #{tpu_custom_call.1} parent=5 // pred_fallthru
      _
  $region6: #{tpu_custom_call.1} parent=0 // loop_footer
    %s27 = sadd.s32 1, %s23
  $region7: #{tpu_custom_call.1} parent=0 // loop_footer_branch
    %22 = sbr.rel target = $region3
  $region8: #{tpu_custom_call.1} parent=0 // loop_exit
    _

</llo_original>
